<compile_context>
chip_gen: v7x
topology: tpu7x:2x2x1
jax: 0.10.0
libtpu: 0.0.40
codegen_flags: <defaults>
</compile_context>

<pallas_src>
import numpy as np
import jax
import jax.numpy as jnp
from jax.experimental import pallas as pl
from jax.experimental.pallas import tpu as pltpu


# ----------------------------- small helpers -----------------------------

def _round_up(x, m):
    return ((x + m - 1) // m) * m


def _cdiv(a, b):
    return -(-a // b)


def _hann_window(win_length):
    # torch.hann_window(win_length) (periodic=True)
    n = np.arange(win_length, dtype=np.float64)
    return 0.5 * (1.0 - np.cos(2.0 * np.pi * n / win_length))


def _pad_center(window, n_fft):
    # torch.stft pads a short window to n_fft, centered
    w = np.zeros(n_fft, dtype=np.float64)
    left = (n_fft - len(window)) // 2
    w[left:left + len(window)] = window
    return w


def _dft_matrices(n_fft):
    # one-sided real DFT as two real matrices (n_fft, n_fft//2 + 1)
    n_freq = n_fft // 2 + 1
    n = np.arange(n_fft, dtype=np.float64)[:, None]
    k = np.arange(n_freq, dtype=np.float64)[None, :]
    ang = 2.0 * np.pi * n * k / n_fft
    return np.cos(ang), -np.sin(ang)


def _hz_to_mel(f):
    return 2595.0 * np.log10(1.0 + np.asarray(f, dtype=np.float64) / 700.0)


def _mel_to_hz(m):
    return 700.0 * (10.0 ** (np.asarray(m, dtype=np.float64) / 2595.0) - 1.0)


def _mel_filterbank(n_freq, n_mels, sample_rate):
    # torchaudio.functional.melscale_fbanks (htk, norm=None, f_min=0, f_max=sr//2)
    all_freqs = np.linspace(0, sample_rate // 2, n_freq)
    m_pts = np.linspace(_hz_to_mel(0.0), _hz_to_mel(float(sample_rate // 2)), n_mels + 2)
    f_pts = _mel_to_hz(m_pts)
    f_diff = f_pts[1:] - f_pts[:-1]                  # (n_mels + 1,)
    slopes = f_pts[None, :] - all_freqs[:, None]     # (n_freq, n_mels + 2)
    down = -slopes[:, :-2] / f_diff[:-1]
    up = slopes[:, 2:] / f_diff[1:]
    return np.maximum(0.0, np.minimum(down, up))     # (n_freq, n_mels)


# ----------------------------- device capability probes -----------------------------

def _tpu_params():
    """(vmem_capacity_bytes, tensorcores_per_chip) with conservative fallbacks."""
    vmem = 64 * 1024 * 1024       # v7x per-TC (smallest current part) -> safe everywhere
    cores = 2                     # a 2-way grid split is near-free on single-core parts
    try:
        info = pltpu.get_tpu_info()
        v = getattr(info, "vmem_capacity_bytes", None)
        if v:
            vmem = int(v)
        for attr in ("num_tensorcores", "tensorcore_count", "num_cores", "core_count"):
            c = getattr(info, attr, None)
            if c:
                cores = int(c)
                break
    except Exception:
        pass
    return vmem, cores


def _probe_single_buffering():
    """Return pl.Buffered(1) if single-buffered BlockSpecs lower+compile, else None."""
    try:
        mode = pl.Buffered(1)

        def _k(x_ref, o_ref):
            o_ref[...] = x_ref[...] * 2.0

        fn = pl.pallas_call(
            _k,
            out_shape=jax.ShapeDtypeStruct((8, 128), jnp.float32),
            grid=(1,),
            in_specs=[pl.BlockSpec((8, 128), lambda i: (0, 0), pipeline_mode=mode)],
            out_specs=pl.BlockSpec((8, 128), lambda i: (0, 0)),
        )
        jax.jit(fn).lower(jnp.zeros((8, 128), jnp.float32)).compile()
        return mode
    except Exception:
        return None


# -------------------- JAX glue: center-padded framing (window folded into DFT) --------------------

def _frames_xy(x, y, n_fft, hop, rows_pad):
    """(B, T) x2 -> (2, rows_pad, n_fft) bf16 frames, center=True with reflect padding.

    The Hann window is folded into the DFT matrices so frames carry raw samples;
    x and y are stacked on a leading axis so every kernel tile can run a single
    MXU matmul over both signals (shared RHS weight staging)."""
    pad = n_fft // 2
    sig = jnp.stack([x, y], axis=0).astype(jnp.bfloat16)          # (2, B, T)
    sig = jnp.pad(sig, ((0, 0), (0, 0), (pad, pad)), mode="reflect")
    T = x.shape[1]
    n_frames = 1 + T // hop
    idx = jnp.arange(n_frames)[:, None] * hop + jnp.arange(n_fft)[None, :]
    fr = sig[:, :, idx].reshape(2, -1, n_fft)                     # (2, B*n_frames, n_fft)
    return jnp.pad(fr, ((0, 0), (0, rows_pad - fr.shape[1]), (0, 0)))


# -------------------- Pallas kernel: STFT power -> mel -> log -> partial L1 sums --------------------

def _make_stft_sc_kernel(rows_valid, tile_rows, tiles_per_chunk,
                         n_freq_pad, n_mels, n_mels_pad):
    groups = tile_rows // 8

    def kernel(f_ref, dft_ref, mfb_ref, out_ref):
        c = pl.program_id(0)          # parallel chunk (megacore) axis
        i = pl.program_id(1)          # sequential row-tile (reduction) axis

        @pl.when(i == 0)
        def _init():
            out_ref[...] = jnp.zeros_like(out_ref)

        # Stack the x tile on the y tile along M: one DFT matmul for both signals.
        frames = jnp.concatenate([f_ref[0], f_ref[1]], axis=0)     # (2*tile_rows, n_fft) bf16

        # STFT via the window-folded DFT; columns [0, n_freq_pad) = Re, rest = Im.
        spec = jnp.dot(frames, dft_ref[...], preferred_element_type=jnp.float32)
        re = spec[:, :n_freq_pad]
        im = spec[:, n_freq_pad:]
        power = (re * re + im * im).astype(jnp.bfloat16)            # VPU; bf16 feeds the MXU

        # power -> mel (bf16 MXU path, f32 accumulation) -> normalized log-mel.
        mel = jnp.dot(power, mfb_ref[...], preferred_element_type=jnp.float32)
        mag = (jnp.log(1e-5 + mel) + 4.0) * 0.25                    # (log(eps+m) - (-4)) / 4

        x_mag = mag[:tile_rows]
        y_mag = mag[tile_rows:]

        # Mask padded frame rows and padded mel lanes (mfb zero-cols would otherwise
        # contribute |log(1e-5)+4|/4 to the denominator).
        row0 = (c * tiles_per_chunk + i) * tile_rows
        rid = row0 + jax.lax.broadcasted_iota(jnp.int32, (tile_rows, n_mels_pad), 0)
        mid = jax.lax.broadcasted_iota(jnp.int32, (tile_rows, n_mels_pad), 1)
        mask = jnp.logical_and(rid < rows_valid, mid < n_mels).astype(jnp.float32)

        num_t = jnp.abs(y_mag - x_mag) * mask       # ||y - x||_1 contributions
        den_t = jnp.abs(y_mag) * mask               # ||y||_1 contributions

        # Collapse only the row axis (sublane-group adds on the VPU); the cross-lane
        # reduction to scalars is deferred out of the kernel.
        num_p = jnp.sum(num_t.reshape(groups, 8, n_mels_pad), axis=0)
        den_p = jnp.sum(den_t.reshape(groups, 8, n_mels_pad), axis=0)

        out_ref[0, 0, :, :] += num_p
        out_ref[0, 1, :, :] += den_p

    return kernel


def _stft_sc_loss(x, y, cfg, vmem_bytes, num_cores, const_mode):
    n_fft = cfg["n_fft"]
    hop = cfg["hop"]
    dft = cfg["dft"]              # (n_fft, 2*n_freq_pad) bf16, Hann window folded in
    mfb = cfg["mfb"]              # (n_freq_pad, n_mels_pad) bf16
    n_freq_pad = cfg["n_freq_pad"]
    n_mels = cfg["n_mels"]
    n_mels_pad = mfb.shape[1]
    two_nfreq = dft.shape[1]

    B, T = x.shape
    n_frames = 1 + T // hop
    rows = B * n_frames

    # ---- generation-aware VMEM budget and tile size ----
    vmem_limit = int(min(112 << 20, max(32 << 20, vmem_bytes * 7 // 8)))
    const_buf = 2 * int(dft.size) + 2 * int(mfb.size)        # bf16, single-buffered
    if const_mode is None:
        const_buf *= 2                                        # fallback: double-buffered
    per_row = 2 * (2 * 2 * n_fft              # frames block, bf16, double-buffered
                   + 2 * n_fft                # in-kernel merged frame copy, bf16
                   + 2 * 4 * 2 * n_freq_pad   # spec + squared temps, f32
                   + 2 * n_freq_pad           # power, bf16
                   + 4 * 4 * n_mels_pad)      # mel / log-mel / |.| temps, f32
    fft_cap = 2048 if n_fft <= 256 else (1024 if n_fft <= 1024 else 512)
    budget = vmem_limit - const_buf - (4 << 20)
    max_rows = max(8, min(fft_cap, (budget // per_row) // 8 * 8))
    tile_rows = min(max_rows, _round_up(rows, 8))

    n_tiles = _cdiv(rows, tile_rows)
    # 2-way megacore split only when each core gets >= 4 tiles; 1 chunk otherwise.
    n_chunks = 2 if (num_cores >= 2 and n_tiles >= 8) else 1
    tiles_per_chunk = _cdiv(n_tiles, n_chunks)
    rows_pad = n_chunks * tiles_per_chunk * tile_rows

    # TODO(synk): framing is still an XLA gather that materializes an n_fft/hop-amplified
    # frame matrix in HBM; moving it in-kernel (signal in pl.ANY + manual strided DMA into
    # a VMEM ring buffer) is the remaining structural lever for the memory-bound small FFTs.
    frames = _frames_xy(x, y, n_fft, hop, rows_pad)           # (2, rows_pad, n_fft) bf16

    const_kw = dict(pipeline_mode=const_mode) if const_mode is not None else {}

    flops = (2 * (2 * rows_pad) * n_fft * two_nfreq
             + 2 * (2 * rows_pad) * n_freq_pad * n_mels_pad)
    bytes_accessed = (2 * rows_pad * n_fft * 2
                      + int(dft.size) * 2 + int(mfb.size) * 2
                      + n_chunks * 2 * 8 * n_mels_pad * 4)

    out = pl.pallas_call(
        _make_stft_sc_kernel(rows, tile_rows, tiles_per_chunk,
                             n_freq_pad, n_mels, n_mels_pad),
        out_shape=jax.ShapeDtypeStruct((n_chunks, 2, 8, n_mels_pad), jnp.float32),
        grid=(n_chunks, tiles_per_chunk),
        in_specs=[
            pl.BlockSpec((2, tile_rows, n_fft),
                         lambda c, i: (0, c * tiles_per_chunk + i, 0)),
            pl.BlockSpec((n_fft, two_nfreq), lambda c, i: (0, 0), **const_kw),
            pl.BlockSpec((n_freq_pad, n_mels_pad), lambda c, i: (0, 0), **const_kw),
        ],
        out_specs=pl.BlockSpec((1, 2, 8, n_mels_pad), lambda c, i: (c, 0, 0, 0)),
        compiler_params=pltpu.CompilerParams(
            dimension_semantics=("parallel", "arbitrary"),
            vmem_limit_bytes=vmem_limit),
        cost_estimate=pl.CostEstimate(
            flops=flops,
            transcendentals=2 * rows_pad * n_mels_pad,
            bytes_accessed=bytes_accessed),
    )(frames, dft, mfb)

    num = jnp.sum(out[:, 0])      # ||y_mag - x_mag||_1 (padded rows/lanes masked to 0)
    den = jnp.sum(out[:, 1])      # ||y_mag||_1
    # Matches the reference: torch.norm(y - x, p=1) / torch.norm(y, p=1) (no eps guard).
    return num / den


# -------------------- MultiResolutionSTFTLoss wrapper --------------------

class MultiResolutionSTFTLossPallas:
    """Pallas-TPU forward pass of MultiResolutionSTFTLoss (spectral convergence on log-mel)."""

    def __init__(self, *, fft_sizes, hop_sizes, win_lengths, sample_rate, n_mels):
        assert len(fft_sizes) == len(hop_sizes) == len(win_lengths)
        self._vmem_bytes, self._num_cores = _tpu_params()
        self._const_mode = _probe_single_buffering()
        n_mels_pad = _round_up(n_mels, 128)                   # lane-dense mel axis
        self.configs = []
        for fs, ss, wl in zip(fft_sizes, hop_sizes, win_lengths):
            n_freq = fs // 2 + 1
            n_freq_pad = _round_up(n_freq, 128)               # lane-dense MXU N / K
            win = _pad_center(_hann_window(wl), fs)           # (fs,)
            cos, msin = _dft_matrices(fs)                     # (fs, n_freq) each
            # Fold the window into the DFT; pack [win*cos | win*(-sin)] side by side,
            # each half zero-padded to a lane-aligned width.
            dft = np.zeros((fs, 2 * n_freq_pad), dtype=np.float64)
            dft[:, :n_freq] = win[:, None] * cos
            dft[:, n_freq_pad:n_freq_pad + n_freq] = win[:, None] * msin
            # Un-stacked mel filterbank (K = n_freq_pad), bf16 for the MXU fast path.
            mfb = np.zeros((n_freq_pad, n_mels_pad), dtype=np.float64)
            mfb[:n_freq, :n_mels] = _mel_filterbank(n_freq, n_mels, sample_rate)
            self.configs.append(dict(
                n_fft=fs, hop=ss, n_freq_pad=n_freq_pad, n_mels=n_mels,
                dft=jnp.asarray(dft, jnp.bfloat16),
                mfb=jnp.asarray(mfb, jnp.bfloat16)))
        self._forward = jax.jit(self._forward_impl)

    def _forward_impl(self, x, y):
        # TODO(synk): the three resolutions could share one pallas_call (resolution as an
        # extra "arbitrary" grid axis + scalar-prefetched offsets) to amortize launch
        # overhead on very short inputs; kept as separate calls for clarity.
        sc_loss = jnp.float32(0.0)
        for cfg in self.configs:
            sc_loss = sc_loss + _stft_sc_loss(x, y, cfg, self._vmem_bytes,
                                              self._num_cores, self._const_mode)
        return sc_loss / len(self.configs)

    def __call__(self, x, y):
        return self._forward(x, y)


if __name__ == "__main__":
    key = jax.random.PRNGKey(0)
    kx, ky = jax.random.split(key)
    B, T = 2, 512
    x = jax.random.normal(kx, (B, T), dtype=jnp.float32)
    y = jax.random.normal(ky, (B, T), dtype=jnp.float32)

    loss_fn = MultiResolutionSTFTLossPallas(
        fft_sizes=[128, 256, 64],
        hop_sizes=[32, 64, 16],
        win_lengths=[96, 192, 48],
        sample_rate=8000,
        n_mels=16,
    )

    loss = jax.block_until_ready(loss_fn(x, y))
    assert bool(jnp.isfinite(loss))
    print("KERNEL_OK")
</pallas_src>

<mosaic_0001>
module attributes {stable_mosaic.version = 11 : i64} {
  func.func @kernel(%arg0: i32, %arg1: i32, %arg2: memref<2x24x256xbf16, #tpu.memory_space<vmem>>, %arg3: memref<256x512xbf16, #tpu.memory_space<vmem>>, %arg4: memref<256x128xbf16, #tpu.memory_space<vmem>>, %arg5: memref<1x2x8x128xf32, #tpu.memory_space<vmem>>) attributes {dimension_semantics = [#tpu.dimension_semantics<parallel>, #tpu.dimension_semantics<arbitrary>], iteration_bounds = array<i64: 1, 1>, scalar_prefetch = 0 : i64, scratch_operands = 0 : i64, tpu.core_type = #tpu.core_type<tc>, window_params = [{transform_indices = @transform_0, window_bounds = array<i64: 2, 24, 256>}, {pipeline_mode = #tpu.pipeline_mode<synchronous>, transform_indices = @transform_1, window_bounds = array<i64: 256, 512>}, {pipeline_mode = #tpu.pipeline_mode<synchronous>, transform_indices = @transform_2, window_bounds = array<i64: 256, 128>}, {transform_indices = @transform_3, window_bounds = array<i64: 1, 2, 8, 128>}]} {
    %c0_i32 = arith.constant 0 : i32
    %0 = arith.cmpi eq, %arg1, %c0_i32 : i32
    %1 = arith.extui %0 : i1 to i32
    %c0_i32_0 = arith.constant 0 : i32
    %2 = arith.cmpi ne, %1, %c0_i32_0 : i32
    scf.if %2 {
      %cst_31 = arith.constant 0.000000e+00 : f32
      %62 = vector.broadcast %cst_31 : f32 to vector<1x2x8x128xf32>
      %c0_32 = arith.constant 0 : index
      %c0_33 = arith.constant 0 : index
      %c0_34 = arith.constant 0 : index
      %c0_35 = arith.constant 0 : index
      %63 = vector.load %arg5[%c0_32, %c0_33, %c0_34, %c0_35] : memref<1x2x8x128xf32, #tpu.memory_space<vmem>>, vector<1x2x8x128xf32>
      tpu.vector_store %arg5[%c0_32, %c0_33, %c0_34, %c0_35], %62 {strides = array<i32>} : memref<1x2x8x128xf32, #tpu.memory_space<vmem>>, vector<1x2x8x128xf32>,
    } else {
    }
    %c0 = arith.constant 0 : index
    %c0_1 = arith.constant 0 : index
    %c0_2 = arith.constant 0 : index
    %3 = vector.load %arg2[%c0, %c0_1, %c0_2] : memref<2x24x256xbf16, #tpu.memory_space<vmem>>, vector<1x24x256xbf16>
    %4 = vector.shape_cast %3 : vector<1x24x256xbf16> to vector<24x256xbf16>
    %c1 = arith.constant 1 : index
    %c0_3 = arith.constant 0 : index
    %c0_4 = arith.constant 0 : index
    %5 = vector.load %arg2[%c1, %c0_3, %c0_4] : memref<2x24x256xbf16, #tpu.memory_space<vmem>>, vector<1x24x256xbf16>
    %6 = vector.shape_cast %5 : vector<1x24x256xbf16> to vector<24x256xbf16>
    %7 = tpu.concatenate %4, %6 in 0 : vector<24x256xbf16>, vector<24x256xbf16> -> vector<48x256xbf16>
    %c0_5 = arith.constant 0 : index
    %c0_6 = arith.constant 0 : index
    %8 = vector.load %arg3[%c0_5, %c0_6] : memref<256x512xbf16, #tpu.memory_space<vmem>>, vector<256x512xbf16>
    %cst = arith.constant dense<0.000000e+00> : vector<48x512xf32>
    %9 = tpu.matmul %7, %8, %cst {dimension_numbers = #tpu.dot_dimension_numbers<[1], [0], [0], [1], [0, 0, 1, 1], [], []>} : vector<48x256xbf16>, vector<256x512xbf16>, vector<48x512xf32> -> vector<48x512xf32>
    %10 = vector.extract_strided_slice %9 {offsets = [0, 0], sizes = [48, 256], strides = [1, 1]} : vector<48x512xf32> to vector<48x256xf32>
    %11 = vector.extract_strided_slice %9 {offsets = [0, 256], sizes = [48, 256], strides = [1, 1]} : vector<48x512xf32> to vector<48x256xf32>
    %12 = arith.mulf %10, %10 : vector<48x256xf32>
    %13 = arith.mulf %11, %11 : vector<48x256xf32>
    %14 = arith.addf %12, %13 : vector<48x256xf32>
    %15 = arith.truncf %14 : vector<48x256xf32> to vector<48x256xbf16>
    %c0_7 = arith.constant 0 : index
    %c0_8 = arith.constant 0 : index
    %16 = vector.load %arg4[%c0_7, %c0_8] : memref<256x128xbf16, #tpu.memory_space<vmem>>, vector<256x128xbf16>
    %cst_9 = arith.constant dense<0.000000e+00> : vector<48x128xf32>
    %17 = tpu.matmul %15, %16, %cst_9 {dimension_numbers = #tpu.dot_dimension_numbers<[1], [0], [0], [1], [0, 0, 1, 1], [], []>} : vector<48x256xbf16>, vector<256x128xbf16>, vector<48x128xf32> -> vector<48x128xf32>
    %cst_10 = arith.constant 9.99999974E-6 : f32
    %18 = vector.broadcast %cst_10 : f32 to vector<48x128xf32>
    %19 = arith.addf %18, %17 : vector<48x128xf32>
    %20 = math.log %19 : vector<48x128xf32>
    %cst_11 = arith.constant 4.000000e+00 : f32
    %21 = vector.broadcast %cst_11 : f32 to vector<48x128xf32>
    %22 = arith.addf %20, %21 : vector<48x128xf32>
    %cst_12 = arith.constant 2.500000e-01 : f32
    %23 = vector.broadcast %cst_12 : f32 to vector<48x128xf32>
    %24 = arith.mulf %22, %23 : vector<48x128xf32>
    %25 = vector.extract_strided_slice %24 {offsets = [0, 0], sizes = [24, 128], strides = [1, 1]} : vector<48x128xf32> to vector<24x128xf32>
    %26 = vector.extract_strided_slice %24 {offsets = [24, 0], sizes = [24, 128], strides = [1, 1]} : vector<48x128xf32> to vector<24x128xf32>
    %c1_i32 = arith.constant 1 : i32
    %27 = arith.muli %arg0, %c1_i32 : i32
    %28 = arith.addi %27, %arg1 : i32
    %c24_i32 = arith.constant 24 : i32
    %29 = arith.muli %28, %c24_i32 : i32
    %30 = tpu.iota {dimensions = array<i32: 0>} : vector<24x128xi32>
    %31 = vector.broadcast %29 : i32 to vector<24x128xi32>
    %32 = arith.addi %31, %30 : vector<24x128xi32>
    %33 = tpu.iota {dimensions = array<i32: 1>} : vector<24x128xi32>
    %c18_i32 = arith.constant 18 : i32
    %34 = vector.broadcast %c18_i32 : i32 to vector<24x128xi32>
    %35 = arith.cmpi slt, %32, %34 : vector<24x128xi32>
    %c16_i32 = arith.constant 16 : i32
    %36 = vector.broadcast %c16_i32 : i32 to vector<24x128xi32>
    %37 = arith.cmpi slt, %33, %36 : vector<24x128xi32>
    %38 = arith.andi %35, %37 : vector<24x128xi1>
    %39 = arith.extui %38 : vector<24x128xi1> to vector<24x128xi32>
    %40 = arith.sitofp %39 : vector<24x128xi32> to vector<24x128xf32>
    %41 = arith.subf %26, %25 : vector<24x128xf32>
    %42 = math.absf %41 : vector<24x128xf32>
    %43 = arith.mulf %42, %40 : vector<24x128xf32>
    %44 = math.absf %26 : vector<24x128xf32>
    %45 = arith.mulf %44, %40 : vector<24x128xf32>
    %46 = vector.shape_cast %43 : vector<24x128xf32> to vector<3x8x128xf32>
    %cst_13 = arith.constant dense<0.000000e+00> : vector<8x128xf32>
    %47 = vector.multi_reduction <add>, %46, %cst_13 [0] : vector<3x8x128xf32> to vector<8x128xf32>
    %48 = vector.shape_cast %45 : vector<24x128xf32> to vector<3x8x128xf32>
    %cst_14 = arith.constant dense<0.000000e+00> : vector<8x128xf32>
    %49 = vector.multi_reduction <add>, %48, %cst_14 [0] : vector<3x8x128xf32> to vector<8x128xf32>
    %c0_15 = arith.constant 0 : index
    %c0_16 = arith.constant 0 : index
    %c0_17 = arith.constant 0 : index
    %c0_18 = arith.constant 0 : index
    %50 = vector.load %arg5[%c0_15, %c0_16, %c0_17, %c0_18] : memref<1x2x8x128xf32, #tpu.memory_space<vmem>>, vector<1x1x8x128xf32>
    %51 = vector.shape_cast %50 : vector<1x1x8x128xf32> to vector<8x128xf32>
    %52 = arith.addf %51, %47 : vector<8x128xf32>
    %c0_19 = arith.constant 0 : index
    %c0_20 = arith.constant 0 : index
    %c0_21 = arith.constant 0 : index
    %c0_22 = arith.constant 0 : index
    %53 = vector.load %arg5[%c0_19, %c0_20, %c0_21, %c0_22] : memref<1x2x8x128xf32, #tpu.memory_space<vmem>>, vector<1x1x8x128xf32>
    %54 = vector.shape_cast %53 : vector<1x1x8x128xf32> to vector<8x128xf32>
    %55 = vector.shape_cast %52 : vector<8x128xf32> to vector<1x1x8x128xf32>
    tpu.vector_store %arg5[%c0_19, %c0_20, %c0_21, %c0_22], %55 {strides = array<i32>} : memref<1x2x8x128xf32, #tpu.memory_space<vmem>>, vector<1x1x8x128xf32>,
    %c0_23 = arith.constant 0 : index
    %c1_24 = arith.constant 1 : index
    %c0_25 = arith.constant 0 : index
    %c0_26 = arith.constant 0 : index
    %56 = vector.load %arg5[%c0_23, %c1_24, %c0_25, %c0_26] : memref<1x2x8x128xf32, #tpu.memory_space<vmem>>, vector<1x1x8x128xf32>
    %57 = vector.shape_cast %56 : vector<1x1x8x128xf32> to vector<8x128xf32>
    %58 = arith.addf %57, %49 : vector<8x128xf32>
    %c0_27 = arith.constant 0 : index
    %c1_28 = arith.constant 1 : index
    %c0_29 = arith.constant 0 : index
    %c0_30 = arith.constant 0 : index
    %59 = vector.load %arg5[%c0_27, %c1_28, %c0_29, %c0_30] : memref<1x2x8x128xf32, #tpu.memory_space<vmem>>, vector<1x1x8x128xf32>
    %60 = vector.shape_cast %59 : vector<1x1x8x128xf32> to vector<8x128xf32>
    %61 = vector.shape_cast %58 : vector<8x128xf32> to vector<1x1x8x128xf32>
    tpu.vector_store %arg5[%c0_27, %c1_28, %c0_29, %c0_30], %61 {strides = array<i32>} : memref<1x2x8x128xf32, #tpu.memory_space<vmem>>, vector<1x1x8x128xf32>,
    return
  }
  func.func @transform_0(%arg0: i32, %arg1: i32) -> (i32, i32, i32) {
    %c1_i32 = arith.constant 1 : i32
    %0 = arith.muli %arg0, %c1_i32 : i32
    %1 = arith.addi %0, %arg1 : i32
    %c0_i32 = arith.constant 0 : i32
    %c0_i32_0 = arith.constant 0 : i32
    %c0_i32_1 = arith.constant 0 : i32
    return %c0_i32, %1, %c0_i32_0 : i32, i32, i32
  }
  func.func @transform_1(%arg0: i32, %arg1: i32) -> (i32, i32) {
    %c0_i32 = arith.constant 0 : i32
    %c0_i32_0 = arith.constant 0 : i32
    %c0_i32_1 = arith.constant 0 : i32
    return %c0_i32, %c0_i32_0 : i32, i32
  }
  func.func @transform_2(%arg0: i32, %arg1: i32) -> (i32, i32) {
    %c0_i32 = arith.constant 0 : i32
    %c0_i32_0 = arith.constant 0 : i32
    %c0_i32_1 = arith.constant 0 : i32
    return %c0_i32, %c0_i32_0 : i32, i32
  }
  func.func @transform_3(%arg0: i32, %arg1: i32) -> (i32, i32, i32, i32) {
    %c0_i32 = arith.constant 0 : i32
    %c0_i32_0 = arith.constant 0 : i32
    %c0_i32_1 = arith.constant 0 : i32
    %c0_i32_2 = arith.constant 0 : i32
    return %arg0, %c0_i32, %c0_i32_0, %c0_i32_1 : i32, i32, i32, i32
  }
}

module attributes {stable_mosaic.version = 11 : i64} {
  func.func @kernel(%arg0: i32, %arg1: i32, %arg2: memref<2x40x128xbf16, #tpu.memory_space<vmem>>, %arg3: memref<128x256xbf16, #tpu.memory_space<vmem>>, %arg4: memref<128x128xbf16, #tpu.memory_space<vmem>>, %arg5: memref<1x2x8x128xf32, #tpu.memory_space<vmem>>) attributes {dimension_semantics = [#tpu.dimension_semantics<parallel>, #tpu.dimension_semantics<arbitrary>], iteration_bounds = array<i64: 1, 1>, scalar_prefetch = 0 : i64, scratch_operands = 0 : i64, tpu.core_type = #tpu.core_type<tc>, window_params = [{transform_indices = @transform_0, window_bounds = array<i64: 2, 40, 128>}, {pipeline_mode = #tpu.pipeline_mode<synchronous>, transform_indices = @transform_1, window_bounds = array<i64: 128, 256>}, {pipeline_mode = #tpu.pipeline_mode<synchronous>, transform_indices = @transform_2, window_bounds = array<i64: 128, 128>}, {transform_indices = @transform_3, window_bounds = array<i64: 1, 2, 8, 128>}]} {
    %c0_i32 = arith.constant 0 : i32
    %0 = arith.cmpi eq, %arg1, %c0_i32 : i32
    %1 = arith.extui %0 : i1 to i32
    %c0_i32_0 = arith.constant 0 : i32
    %2 = arith.cmpi ne, %1, %c0_i32_0 : i32
    scf.if %2 {
      %cst_31 = arith.constant 0.000000e+00 : f32
      %62 = vector.broadcast %cst_31 : f32 to vector<1x2x8x128xf32>
      %c0_32 = arith.constant 0 : index
      %c0_33 = arith.constant 0 : index
      %c0_34 = arith.constant 0 : index
      %c0_35 = arith.constant 0 : index
      %63 = vector.load %arg5[%c0_32, %c0_33, %c0_34, %c0_35] : memref<1x2x8x128xf32, #tpu.memory_space<vmem>>, vector<1x2x8x128xf32>
      tpu.vector_store %arg5[%c0_32, %c0_33, %c0_34, %c0_35], %62 {strides = array<i32>} : memref<1x2x8x128xf32, #tpu.memory_space<vmem>>, vector<1x2x8x128xf32>,
    } else {
    }
    %c0 = arith.constant 0 : index
    %c0_1 = arith.constant 0 : index
    %c0_2 = arith.constant 0 : index
    %3 = vector.load %arg2[%c0, %c0_1, %c0_2] : memref<2x40x128xbf16, #tpu.memory_space<vmem>>, vector<1x40x128xbf16>
    %4 = vector.shape_cast %3 : vector<1x40x128xbf16> to vector<40x128xbf16>
    %c1 = arith.constant 1 : index
    %c0_3 = arith.constant 0 : index
    %c0_4 = arith.constant 0 : index
    %5 = vector.load %arg2[%c1, %c0_3, %c0_4] : memref<2x40x128xbf16, #tpu.memory_space<vmem>>, vector<1x40x128xbf16>
    %6 = vector.shape_cast %5 : vector<1x40x128xbf16> to vector<40x128xbf16>
    %7 = tpu.concatenate %4, %6 in 0 : vector<40x128xbf16>, vector<40x128xbf16> -> vector<80x128xbf16>
    %c0_5 = arith.constant 0 : index
    %c0_6 = arith.constant 0 : index
    %8 = vector.load %arg3[%c0_5, %c0_6] : memref<128x256xbf16, #tpu.memory_space<vmem>>, vector<128x256xbf16>
    %cst = arith.constant dense<0.000000e+00> : vector<80x256xf32>
    %9 = tpu.matmul %7, %8, %cst {dimension_numbers = #tpu.dot_dimension_numbers<[1], [0], [0], [1], [0, 0, 1, 1], [], []>} : vector<80x128xbf16>, vector<128x256xbf16>, vector<80x256xf32> -> vector<80x256xf32>
    %10 = vector.extract_strided_slice %9 {offsets = [0, 0], sizes = [80, 128], strides = [1, 1]} : vector<80x256xf32> to vector<80x128xf32>
    %11 = vector.extract_strided_slice %9 {offsets = [0, 128], sizes = [80, 128], strides = [1, 1]} : vector<80x256xf32> to vector<80x128xf32>
    %12 = arith.mulf %10, %10 : vector<80x128xf32>
    %13 = arith.mulf %11, %11 : vector<80x128xf32>
    %14 = arith.addf %12, %13 : vector<80x128xf32>
    %15 = arith.truncf %14 : vector<80x128xf32> to vector<80x128xbf16>
    %c0_7 = arith.constant 0 : index
    %c0_8 = arith.constant 0 : index
    %16 = vector.load %arg4[%c0_7, %c0_8] : memref<128x128xbf16, #tpu.memory_space<vmem>>, vector<128x128xbf16>
    %cst_9 = arith.constant dense<0.000000e+00> : vector<80x128xf32>
    %17 = tpu.matmul %15, %16, %cst_9 {dimension_numbers = #tpu.dot_dimension_numbers<[1], [0], [0], [1], [0, 0, 1, 1], [], []>} : vector<80x128xbf16>, vector<128x128xbf16>, vector<80x128xf32> -> vector<80x128xf32>
    %cst_10 = arith.constant 9.99999974E-6 : f32
    %18 = vector.broadcast %cst_10 : f32 to vector<80x128xf32>
    %19 = arith.addf %18, %17 : vector<80x128xf32>
    %20 = math.log %19 : vector<80x128xf32>
    %cst_11 = arith.constant 4.000000e+00 : f32
    %21 = vector.broadcast %cst_11 : f32 to vector<80x128xf32>
    %22 = arith.addf %20, %21 : vector<80x128xf32>
    %cst_12 = arith.constant 2.500000e-01 : f32
    %23 = vector.broadcast %cst_12 : f32 to vector<80x128xf32>
    %24 = arith.mulf %22, %23 : vector<80x128xf32>
    %25 = vector.extract_strided_slice %24 {offsets = [0, 0], sizes = [40, 128], strides = [1, 1]} : vector<80x128xf32> to vector<40x128xf32>
    %26 = vector.extract_strided_slice %24 {offsets = [40, 0], sizes = [40, 128], strides = [1, 1]} : vector<80x128xf32> to vector<40x128xf32>
    %c1_i32 = arith.constant 1 : i32
    %27 = arith.muli %arg0, %c1_i32 : i32
    %28 = arith.addi %27, %arg1 : i32
    %c40_i32 = arith.constant 40 : i32
    %29 = arith.muli %28, %c40_i32 : i32
    %30 = tpu.iota {dimensions = array<i32: 0>} : vector<40x128xi32>
    %31 = vector.broadcast %29 : i32 to vector<40x128xi32>
    %32 = arith.addi %31, %30 : vector<40x128xi32>
    %33 = tpu.iota {dimensions = array<i32: 1>} : vector<40x128xi32>
    %c34_i32 = arith.constant 34 : i32
    %34 = vector.broadcast %c34_i32 : i32 to vector<40x128xi32>
    %35 = arith.cmpi slt, %32, %34 : vector<40x128xi32>
    %c16_i32 = arith.constant 16 : i32
    %36 = vector.broadcast %c16_i32 : i32 to vector<40x128xi32>
    %37 = arith.cmpi slt, %33, %36 : vector<40x128xi32>
    %38 = arith.andi %35, %37 : vector<40x128xi1>
    %39 = arith.extui %38 : vector<40x128xi1> to vector<40x128xi32>
    %40 = arith.sitofp %39 : vector<40x128xi32> to vector<40x128xf32>
    %41 = arith.subf %26, %25 : vector<40x128xf32>
    %42 = math.absf %41 : vector<40x128xf32>
    %43 = arith.mulf %42, %40 : vector<40x128xf32>
    %44 = math.absf %26 : vector<40x128xf32>
    %45 = arith.mulf %44, %40 : vector<40x128xf32>
    %46 = vector.shape_cast %43 : vector<40x128xf32> to vector<5x8x128xf32>
    %cst_13 = arith.constant dense<0.000000e+00> : vector<8x128xf32>
    %47 = vector.multi_reduction <add>, %46, %cst_13 [0] : vector<5x8x128xf32> to vector<8x128xf32>
    %48 = vector.shape_cast %45 : vector<40x128xf32> to vector<5x8x128xf32>
    %cst_14 = arith.constant dense<0.000000e+00> : vector<8x128xf32>
    %49 = vector.multi_reduction <add>, %48, %cst_14 [0] : vector<5x8x128xf32> to vector<8x128xf32>
    %c0_15 = arith.constant 0 : index
    %c0_16 = arith.constant 0 : index
    %c0_17 = arith.constant 0 : index
    %c0_18 = arith.constant 0 : index
    %50 = vector.load %arg5[%c0_15, %c0_16, %c0_17, %c0_18] : memref<1x2x8x128xf32, #tpu.memory_space<vmem>>, vector<1x1x8x128xf32>
    %51 = vector.shape_cast %50 : vector<1x1x8x128xf32> to vector<8x128xf32>
    %52 = arith.addf %51, %47 : vector<8x128xf32>
    %c0_19 = arith.constant 0 : index
    %c0_20 = arith.constant 0 : index
    %c0_21 = arith.constant 0 : index
    %c0_22 = arith.constant 0 : index
    %53 = vector.load %arg5[%c0_19, %c0_20, %c0_21, %c0_22] : memref<1x2x8x128xf32, #tpu.memory_space<vmem>>, vector<1x1x8x128xf32>
    %54 = vector.shape_cast %53 : vector<1x1x8x128xf32> to vector<8x128xf32>
    %55 = vector.shape_cast %52 : vector<8x128xf32> to vector<1x1x8x128xf32>
    tpu.vector_store %arg5[%c0_19, %c0_20, %c0_21, %c0_22], %55 {strides = array<i32>} : memref<1x2x8x128xf32, #tpu.memory_space<vmem>>, vector<1x1x8x128xf32>,
    %c0_23 = arith.constant 0 : index
    %c1_24 = arith.constant 1 : index
    %c0_25 = arith.constant 0 : index
    %c0_26 = arith.constant 0 : index
    %56 = vector.load %arg5[%c0_23, %c1_24, %c0_25, %c0_26] : memref<1x2x8x128xf32, #tpu.memory_space<vmem>>, vector<1x1x8x128xf32>
    %57 = vector.shape_cast %56 : vector<1x1x8x128xf32> to vector<8x128xf32>
    %58 = arith.addf %57, %49 : vector<8x128xf32>
    %c0_27 = arith.constant 0 : index
    %c1_28 = arith.constant 1 : index
    %c0_29 = arith.constant 0 : index
    %c0_30 = arith.constant 0 : index
    %59 = vector.load %arg5[%c0_27, %c1_28, %c0_29, %c0_30] : memref<1x2x8x128xf32, #tpu.memory_space<vmem>>, vector<1x1x8x128xf32>
    %60 = vector.shape_cast %59 : vector<1x1x8x128xf32> to vector<8x128xf32>
    %61 = vector.shape_cast %58 : vector<8x128xf32> to vector<1x1x8x128xf32>
    tpu.vector_store %arg5[%c0_27, %c1_28, %c0_29, %c0_30], %61 {strides = array<i32>} : memref<1x2x8x128xf32, #tpu.memory_space<vmem>>, vector<1x1x8x128xf32>,
    return
  }
  func.func @transform_0(%arg0: i32, %arg1: i32) -> (i32, i32, i32) {
    %c1_i32 = arith.constant 1 : i32
    %0 = arith.muli %arg0, %c1_i32 : i32
    %1 = arith.addi %0, %arg1 : i32
    %c0_i32 = arith.constant 0 : i32
    %c0_i32_0 = arith.constant 0 : i32
    %c0_i32_1 = arith.constant 0 : i32
    return %c0_i32, %1, %c0_i32_0 : i32, i32, i32
  }
  func.func @transform_1(%arg0: i32, %arg1: i32) -> (i32, i32) {
    %c0_i32 = arith.constant 0 : i32
    %c0_i32_0 = arith.constant 0 : i32
    %c0_i32_1 = arith.constant 0 : i32
    return %c0_i32, %c0_i32_0 : i32, i32
  }
  func.func @transform_2(%arg0: i32, %arg1: i32) -> (i32, i32) {
    %c0_i32 = arith.constant 0 : i32
    %c0_i32_0 = arith.constant 0 : i32
    %c0_i32_1 = arith.constant 0 : i32
    return %c0_i32, %c0_i32_0 : i32, i32
  }
  func.func @transform_3(%arg0: i32, %arg1: i32) -> (i32, i32, i32, i32) {
    %c0_i32 = arith.constant 0 : i32
    %c0_i32_0 = arith.constant 0 : i32
    %c0_i32_1 = arith.constant 0 : i32
    %c0_i32_2 = arith.constant 0 : i32
    return %arg0, %c0_i32, %c0_i32_0, %c0_i32_1 : i32, i32, i32, i32
  }
}

module attributes {stable_mosaic.version = 11 : i64} {
  func.func @kernel(%arg0: i32, %arg1: i32, %arg2: memref<2x72x64xbf16, #tpu.memory_space<vmem>>, %arg3: memref<64x256xbf16, #tpu.memory_space<vmem>>, %arg4: memref<128x128xbf16, #tpu.memory_space<vmem>>, %arg5: memref<1x2x8x128xf32, #tpu.memory_space<vmem>>) attributes {dimension_semantics = [#tpu.dimension_semantics<parallel>, #tpu.dimension_semantics<arbitrary>], iteration_bounds = array<i64: 1, 1>, scalar_prefetch = 0 : i64, scratch_operands = 0 : i64, tpu.core_type = #tpu.core_type<tc>, window_params = [{transform_indices = @transform_0, window_bounds = array<i64: 2, 72, 64>}, {pipeline_mode = #tpu.pipeline_mode<synchronous>, transform_indices = @transform_1, window_bounds = array<i64: 64, 256>}, {pipeline_mode = #tpu.pipeline_mode<synchronous>, transform_indices = @transform_2, window_bounds = array<i64: 128, 128>}, {transform_indices = @transform_3, window_bounds = array<i64: 1, 2, 8, 128>}]} {
    %c0_i32 = arith.constant 0 : i32
    %0 = arith.cmpi eq, %arg1, %c0_i32 : i32
    %1 = arith.extui %0 : i1 to i32
    %c0_i32_0 = arith.constant 0 : i32
    %2 = arith.cmpi ne, %1, %c0_i32_0 : i32
    scf.if %2 {
      %cst_31 = arith.constant 0.000000e+00 : f32
      %62 = vector.broadcast %cst_31 : f32 to vector<1x2x8x128xf32>
      %c0_32 = arith.constant 0 : index
      %c0_33 = arith.constant 0 : index
      %c0_34 = arith.constant 0 : index
      %c0_35 = arith.constant 0 : index
      %63 = vector.load %arg5[%c0_32, %c0_33, %c0_34, %c0_35] : memref<1x2x8x128xf32, #tpu.memory_space<vmem>>, vector<1x2x8x128xf32>
      tpu.vector_store %arg5[%c0_32, %c0_33, %c0_34, %c0_35], %62 {strides = array<i32>} : memref<1x2x8x128xf32, #tpu.memory_space<vmem>>, vector<1x2x8x128xf32>,
    } else {
    }
    %c0 = arith.constant 0 : index
    %c0_1 = arith.constant 0 : index
    %c0_2 = arith.constant 0 : index
    %3 = vector.load %arg2[%c0, %c0_1, %c0_2] : memref<2x72x64xbf16, #tpu.memory_space<vmem>>, vector<1x72x64xbf16>
    %4 = vector.shape_cast %3 : vector<1x72x64xbf16> to vector<72x64xbf16>
    %c1 = arith.constant 1 : index
    %c0_3 = arith.constant 0 : index
    %c0_4 = arith.constant 0 : index
    %5 = vector.load %arg2[%c1, %c0_3, %c0_4] : memref<2x72x64xbf16, #tpu.memory_space<vmem>>, vector<1x72x64xbf16>
    %6 = vector.shape_cast %5 : vector<1x72x64xbf16> to vector<72x64xbf16>
    %7 = tpu.concatenate %4, %6 in 0 : vector<72x64xbf16>, vector<72x64xbf16> -> vector<144x64xbf16>
    %c0_5 = arith.constant 0 : index
    %c0_6 = arith.constant 0 : index
    %8 = vector.load %arg3[%c0_5, %c0_6] : memref<64x256xbf16, #tpu.memory_space<vmem>>, vector<64x256xbf16>
    %cst = arith.constant dense<0.000000e+00> : vector<144x256xf32>
    %9 = tpu.matmul %7, %8, %cst {dimension_numbers = #tpu.dot_dimension_numbers<[1], [0], [0], [1], [0, 0, 1, 1], [], []>} : vector<144x64xbf16>, vector<64x256xbf16>, vector<144x256xf32> -> vector<144x256xf32>
    %10 = vector.extract_strided_slice %9 {offsets = [0, 0], sizes = [144, 128], strides = [1, 1]} : vector<144x256xf32> to vector<144x128xf32>
    %11 = vector.extract_strided_slice %9 {offsets = [0, 128], sizes = [144, 128], strides = [1, 1]} : vector<144x256xf32> to vector<144x128xf32>
    %12 = arith.mulf %10, %10 : vector<144x128xf32>
    %13 = arith.mulf %11, %11 : vector<144x128xf32>
    %14 = arith.addf %12, %13 : vector<144x128xf32>
    %15 = arith.truncf %14 : vector<144x128xf32> to vector<144x128xbf16>
    %c0_7 = arith.constant 0 : index
    %c0_8 = arith.constant 0 : index
    %16 = vector.load %arg4[%c0_7, %c0_8] : memref<128x128xbf16, #tpu.memory_space<vmem>>, vector<128x128xbf16>
    %cst_9 = arith.constant dense<0.000000e+00> : vector<144x128xf32>
    %17 = tpu.matmul %15, %16, %cst_9 {dimension_numbers = #tpu.dot_dimension_numbers<[1], [0], [0], [1], [0, 0, 1, 1], [], []>} : vector<144x128xbf16>, vector<128x128xbf16>, vector<144x128xf32> -> vector<144x128xf32>
    %cst_10 = arith.constant 9.99999974E-6 : f32
    %18 = vector.broadcast %cst_10 : f32 to vector<144x128xf32>
    %19 = arith.addf %18, %17 : vector<144x128xf32>
    %20 = math.log %19 : vector<144x128xf32>
    %cst_11 = arith.constant 4.000000e+00 : f32
    %21 = vector.broadcast %cst_11 : f32 to vector<144x128xf32>
    %22 = arith.addf %20, %21 : vector<144x128xf32>
    %cst_12 = arith.constant 2.500000e-01 : f32
    %23 = vector.broadcast %cst_12 : f32 to vector<144x128xf32>
    %24 = arith.mulf %22, %23 : vector<144x128xf32>
    %25 = vector.extract_strided_slice %24 {offsets = [0, 0], sizes = [72, 128], strides = [1, 1]} : vector<144x128xf32> to vector<72x128xf32>
    %26 = vector.extract_strided_slice %24 {offsets = [72, 0], sizes = [72, 128], strides = [1, 1]} : vector<144x128xf32> to vector<72x128xf32>
    %c1_i32 = arith.constant 1 : i32
    %27 = arith.muli %arg0, %c1_i32 : i32
    %28 = arith.addi %27, %arg1 : i32
    %c72_i32 = arith.constant 72 : i32
    %29 = arith.muli %28, %c72_i32 : i32
    %30 = tpu.iota {dimensions = array<i32: 0>} : vector<72x128xi32>
    %31 = vector.broadcast %29 : i32 to vector<72x128xi32>
    %32 = arith.addi %31, %30 : vector<72x128xi32>
    %33 = tpu.iota {dimensions = array<i32: 1>} : vector<72x128xi32>
    %c66_i32 = arith.constant 66 : i32
    %34 = vector.broadcast %c66_i32 : i32 to vector<72x128xi32>
    %35 = arith.cmpi slt, %32, %34 : vector<72x128xi32>
    %c16_i32 = arith.constant 16 : i32
    %36 = vector.broadcast %c16_i32 : i32 to vector<72x128xi32>
    %37 = arith.cmpi slt, %33, %36 : vector<72x128xi32>
    %38 = arith.andi %35, %37 : vector<72x128xi1>
    %39 = arith.extui %38 : vector<72x128xi1> to vector<72x128xi32>
    %40 = arith.sitofp %39 : vector<72x128xi32> to vector<72x128xf32>
    %41 = arith.subf %26, %25 : vector<72x128xf32>
    %42 = math.absf %41 : vector<72x128xf32>
    %43 = arith.mulf %42, %40 : vector<72x128xf32>
    %44 = math.absf %26 : vector<72x128xf32>
    %45 = arith.mulf %44, %40 : vector<72x128xf32>
    %46 = vector.shape_cast %43 : vector<72x128xf32> to vector<9x8x128xf32>
    %cst_13 = arith.constant dense<0.000000e+00> : vector<8x128xf32>
    %47 = vector.multi_reduction <add>, %46, %cst_13 [0] : vector<9x8x128xf32> to vector<8x128xf32>
    %48 = vector.shape_cast %45 : vector<72x128xf32> to vector<9x8x128xf32>
    %cst_14 = arith.constant dense<0.000000e+00> : vector<8x128xf32>
    %49 = vector.multi_reduction <add>, %48, %cst_14 [0] : vector<9x8x128xf32> to vector<8x128xf32>
    %c0_15 = arith.constant 0 : index
    %c0_16 = arith.constant 0 : index
    %c0_17 = arith.constant 0 : index
    %c0_18 = arith.constant 0 : index
    %50 = vector.load %arg5[%c0_15, %c0_16, %c0_17, %c0_18] : memref<1x2x8x128xf32, #tpu.memory_space<vmem>>, vector<1x1x8x128xf32>
    %51 = vector.shape_cast %50 : vector<1x1x8x128xf32> to vector<8x128xf32>
    %52 = arith.addf %51, %47 : vector<8x128xf32>
    %c0_19 = arith.constant 0 : index
    %c0_20 = arith.constant 0 : index
    %c0_21 = arith.constant 0 : index
    %c0_22 = arith.constant 0 : index
    %53 = vector.load %arg5[%c0_19, %c0_20, %c0_21, %c0_22] : memref<1x2x8x128xf32, #tpu.memory_space<vmem>>, vector<1x1x8x128xf32>
    %54 = vector.shape_cast %53 : vector<1x1x8x128xf32> to vector<8x128xf32>
    %55 = vector.shape_cast %52 : vector<8x128xf32> to vector<1x1x8x128xf32>
    tpu.vector_store %arg5[%c0_19, %c0_20, %c0_21, %c0_22], %55 {strides = array<i32>} : memref<1x2x8x128xf32, #tpu.memory_space<vmem>>, vector<1x1x8x128xf32>,
    %c0_23 = arith.constant 0 : index
    %c1_24 = arith.constant 1 : index
    %c0_25 = arith.constant 0 : index
    %c0_26 = arith.constant 0 : index
    %56 = vector.load %arg5[%c0_23, %c1_24, %c0_25, %c0_26] : memref<1x2x8x128xf32, #tpu.memory_space<vmem>>, vector<1x1x8x128xf32>
    %57 = vector.shape_cast %56 : vector<1x1x8x128xf32> to vector<8x128xf32>
    %58 = arith.addf %57, %49 : vector<8x128xf32>
    %c0_27 = arith.constant 0 : index
    %c1_28 = arith.constant 1 : index
    %c0_29 = arith.constant 0 : index
    %c0_30 = arith.constant 0 : index
    %59 = vector.load %arg5[%c0_27, %c1_28, %c0_29, %c0_30] : memref<1x2x8x128xf32, #tpu.memory_space<vmem>>, vector<1x1x8x128xf32>
    %60 = vector.shape_cast %59 : vector<1x1x8x128xf32> to vector<8x128xf32>
    %61 = vector.shape_cast %58 : vector<8x128xf32> to vector<1x1x8x128xf32>
    tpu.vector_store %arg5[%c0_27, %c1_28, %c0_29, %c0_30], %61 {strides = array<i32>} : memref<1x2x8x128xf32, #tpu.memory_space<vmem>>, vector<1x1x8x128xf32>,
    return
  }
  func.func @transform_0(%arg0: i32, %arg1: i32) -> (i32, i32, i32) {
    %c1_i32 = arith.constant 1 : i32
    %0 = arith.muli %arg0, %c1_i32 : i32
    %1 = arith.addi %0, %arg1 : i32
    %c0_i32 = arith.constant 0 : i32
    %c0_i32_0 = arith.constant 0 : i32
    %c0_i32_1 = arith.constant 0 : i32
    return %c0_i32, %1, %c0_i32_0 : i32, i32, i32
  }
  func.func @transform_1(%arg0: i32, %arg1: i32) -> (i32, i32) {
    %c0_i32 = arith.constant 0 : i32
    %c0_i32_0 = arith.constant 0 : i32
    %c0_i32_1 = arith.constant 0 : i32
    return %c0_i32, %c0_i32_0 : i32, i32
  }
  func.func @transform_2(%arg0: i32, %arg1: i32) -> (i32, i32) {
    %c0_i32 = arith.constant 0 : i32
    %c0_i32_0 = arith.constant 0 : i32
    %c0_i32_1 = arith.constant 0 : i32
    return %c0_i32, %c0_i32_0 : i32, i32
  }
  func.func @transform_3(%arg0: i32, %arg1: i32) -> (i32, i32, i32, i32) {
    %c0_i32 = arith.constant 0 : i32
    %c0_i32_0 = arith.constant 0 : i32
    %c0_i32_1 = arith.constant 0 : i32
    %c0_i32_2 = arith.constant 0 : i32
    return %arg0, %c0_i32, %c0_i32_0, %c0_i32_1 : i32, i32, i32, i32
  }
}

</mosaic_0001>

<llo_original>
// kernel: _forward_impl.4
$region0: #{_forward_impl.4}
  #allocation0 [shape = 'u32[]', space=smem, size = 0x4, offset = 0x4, fixed_abs, tag = 'smem constant byte address 0x4 - core index']
  #allocation1 [shape = 'u32[144,128]{1,0:T(1,128)}', space=vmem, size = 0x12000, scoped, tag = 'internal scratch']
  %s0 = inlined_call_operand.vmem [shape: bf16[2,24,256], index: 0, kind: input, shape index: {}]
  %s1 = inlined_call_operand.vmem [shape: bf16[256,512], index: 1, kind: input, shape index: {}]
  %s2 = inlined_call_operand.vmem [shape: bf16[256,128], index: 2, kind: input, shape index: {}]
  %s3 = inlined_call_operand.vmem [shape: f32[1,2,8,128], index: 3, kind: output, shape index: {}]
  %s4 = sld [smem:[#allocation0]]
  $region26: #{_forward_impl.4} parent=0
    _
  %s6 = ssub.s32 1, %s4
  %s7 = scalar_select 0, %s6, %s4
  // Predicated region
  $region2: #{_forward_impl.4} parent=0 // pred_check
    _
  $region3: #{_forward_impl.4} parent=0 // pred_check_branch
    %9 = sbr.rel (0) target = $region5
  $region4: #{_forward_impl.4} parent=0 // pred_region
    %s10 = sadd.s32 0, 0
    %s11 = smul.u32 3, %s10
    %p12 = scmp.lt.s32.totalorder %s11, 2
    %s13 = scalar_select %p12, %s11, 2
    %s14 = smul.addr %s13, 2
    %s15 = smul.addr %s14, 4
    %s16 = scalar_lea.vmem %s0, %s15
    %s17 = sadd.s32 0, 0
    %s18 = smul.u32 3, %s17
  $region5: #{_forward_impl.4} parent=0 // pred_fallthru
    _
  // Predicated region
  $region6: #{_forward_impl.4} parent=0 // pred_check
    _
  $region7: #{_forward_impl.4} parent=0 // pred_check_branch
    %20 = sbr.rel (0) target = $region9
  $region8: #{_forward_impl.4} parent=0 // pred_region
    _
  $region9: #{_forward_impl.4} parent=0 // pred_fallthru
    _
  // Predicated region
  $region10: #{_forward_impl.4} parent=0 // pred_check
    _
  $region11: #{_forward_impl.4} parent=0 // pred_check_branch
    %22 = sbr.rel (0) target = $region13
  $region12: #{_forward_impl.4} parent=0 // pred_region
    _
  $region13: #{_forward_impl.4} parent=0 // pred_fallthru
    _
  %s23 = sadd.s32 0, 0
  %s24 = smul.u32 3, %s23
  %p25 = scmp.lt.s32.totalorder %s24, 2
  %s26 = scalar_select %p25, %s24, 2
  %s27 = smul.addr %s26, 2
  %s28 = smul.addr %s27, 4
  %s29 = scalar_lea.vmem %s0, %s28
  %s30 = sadd.s32 0, 0
  %s31 = smul.u32 3, %s30
  %p32 = scmp.lt.s32.totalorder %s31, 2
  %s33 = scalar_select %p32, %s31, 2
  %s34 = smul.addr %s33, 2
  %s35 = smul.addr %s34, 4
  %s36 = scalar_lea.vmem %s0, %s35
  %s37 = sadd.s32 0, 0
  %s38 = smul.u32 3, %s37
  %p40 = scmp.eq.s32.totalorder 0, 0
  // Predicated region
  $region14: #{_forward_impl.4} parent=0 // pred_check
    %p41 = pneg %p40
  $region15: #{_forward_impl.4} parent=0 // pred_check_branch
    %43 = sbr.rel (%p41) target = $region17
  $region16: #{_forward_impl.4} parent=0 // pred_region
    %44 = vst [vmem:[%s3] sm:$0xff] 0.0
    %45 = vst [vmem:[%s3 + $0x8] sm:$0xff] 0.0
  $region17: #{_forward_impl.4} parent=0 // pred_fallthru
    _
  %v46 = vld [vmem:[%s36] sm:$0xff]
  %v47 = vld [vmem:[%s36 + $0x8] sm:$0xff]
  %v48 = vld [vmem:[%s36 + $0x10] sm:$0xff]
  %s49 = scalar_lea.vmem %s36, 24
  %v50 = vld [vmem:[%s49] sm:$0xff]
  %v51 = vld [vmem:[%s49 + $0x8] sm:$0xff]
  %v52 = vld [vmem:[%s49 + $0x10] sm:$0xff]
  %v56 = vunpack.c.l.b16 %v46
  %v57 = vunpack.c.h.b16 %v46
  %v58 = vunpack.c.l.b16 %v47
  %v59 = vunpack.c.h.b16 %v47
  %v60 = vunpack.c.l.b16 %v48
  %v61 = vunpack.c.h.b16 %v48
  %v62 = vpack.c.b16 %v58, %v56
  %v63 = vpack.c.b16 %v59, %v57
  %v64 = vpack.c.b16 %v60, %v60
  %v65 = vpack.c.b16 %v61, %v61
  %v71 = vunpack.c.l.b16 %v50
  %v72 = vunpack.c.h.b16 %v50
  %v73 = vunpack.c.l.b16 %v51
  %v74 = vunpack.c.h.b16 %v51
  %v75 = vunpack.c.l.b16 %v52
  %v76 = vunpack.c.h.b16 %v52
  %v77 = vpack.c.b16 %v71, %v71
  %v78 = vpack.c.b16 %v72, %v72
  %v79 = vpack.c.b16 %v75, %v73
  %v80 = vpack.c.b16 %v76, %v74
  %vm83 = vcmask 1043456
  %v86 = vsel %vm83, %v64, %v77
  %v90 = vsel %vm83, %v65, %v78
  %v92 = vld [vmem:[%s1] sm:$0xff]
  %v93 = vld [vmem:[%s1 + $0x8] sm:$0xff]
  %v94 = vld [vmem:[%s1 + $0x10] sm:$0xff]
  %v95 = vld [vmem:[%s1 + $0x18] sm:$0xff]
  %v96 = vld [vmem:[%s1 + $0x20] sm:$0xff]
  %v97 = vld [vmem:[%s1 + $0x28] sm:$0xff]
  %v98 = vld [vmem:[%s1 + $0x30] sm:$0xff]
  %v99 = vld [vmem:[%s1 + $0x38] sm:$0xff]
  %v100 = vld [vmem:[%s1 + $0x40] sm:$0xff]
  %v101 = vld [vmem:[%s1 + $0x48] sm:$0xff]
  %v102 = vld [vmem:[%s1 + $0x50] sm:$0xff]
  %v103 = vld [vmem:[%s1 + $0x58] sm:$0xff]
  %v104 = vld [vmem:[%s1 + $0x60] sm:$0xff]
  %v105 = vld [vmem:[%s1 + $0x68] sm:$0xff]
  %v106 = vld [vmem:[%s1 + $0x70] sm:$0xff]
  %v107 = vld [vmem:[%s1 + $0x78] sm:$0xff]
  %v108 = vld [vmem:[%s1 + $0x80] sm:$0xff]
  %v109 = vld [vmem:[%s1 + $0x88] sm:$0xff]
  %v110 = vld [vmem:[%s1 + $0x90] sm:$0xff]
  %v111 = vld [vmem:[%s1 + $0x98] sm:$0xff]
  %v112 = vld [vmem:[%s1 + $0xa0] sm:$0xff]
  %v113 = vld [vmem:[%s1 + $0xa8] sm:$0xff]
  %v114 = vld [vmem:[%s1 + $0xb0] sm:$0xff]
  %v115 = vld [vmem:[%s1 + $0xb8] sm:$0xff]
  %v116 = vld [vmem:[%s1 + $0xc0] sm:$0xff]
  %v117 = vld [vmem:[%s1 + $0xc8] sm:$0xff]
  %v118 = vld [vmem:[%s1 + $0xd0] sm:$0xff]
  %v119 = vld [vmem:[%s1 + $0xd8] sm:$0xff]
  %v120 = vld [vmem:[%s1 + $0xe0] sm:$0xff]
  %v121 = vld [vmem:[%s1 + $0xe8] sm:$0xff]
  %v122 = vld [vmem:[%s1 + $0xf0] sm:$0xff]
  %v123 = vld [vmem:[%s1 + $0xf8] sm:$0xff]
  %v124 = vld [vmem:[%s1 + $0x100] sm:$0xff]
  %v125 = vld [vmem:[%s1 + $0x108] sm:$0xff]
  %v126 = vld [vmem:[%s1 + $0x110] sm:$0xff]
  %v127 = vld [vmem:[%s1 + $0x118] sm:$0xff]
  %v128 = vld [vmem:[%s1 + $0x120] sm:$0xff]
  %v129 = vld [vmem:[%s1 + $0x128] sm:$0xff]
  %v130 = vld [vmem:[%s1 + $0x130] sm:$0xff]
  %v131 = vld [vmem:[%s1 + $0x138] sm:$0xff]
  %v132 = vld [vmem:[%s1 + $0x140] sm:$0xff]
  %v133 = vld [vmem:[%s1 + $0x148] sm:$0xff]
  %v134 = vld [vmem:[%s1 + $0x150] sm:$0xff]
  %v135 = vld [vmem:[%s1 + $0x158] sm:$0xff]
  %v136 = vld [vmem:[%s1 + $0x160] sm:$0xff]
  %v137 = vld [vmem:[%s1 + $0x168] sm:$0xff]
  %v138 = vld [vmem:[%s1 + $0x170] sm:$0xff]
  %v139 = vld [vmem:[%s1 + $0x178] sm:$0xff]
  %v140 = vld [vmem:[%s1 + $0x180] sm:$0xff]
  %v141 = vld [vmem:[%s1 + $0x188] sm:$0xff]
  %v142 = vld [vmem:[%s1 + $0x190] sm:$0xff]
  %v143 = vld [vmem:[%s1 + $0x198] sm:$0xff]
  %v144 = vld [vmem:[%s1 + $0x1a0] sm:$0xff]
  %v145 = vld [vmem:[%s1 + $0x1a8] sm:$0xff]
  %v146 = vld [vmem:[%s1 + $0x1b0] sm:$0xff]
  %v147 = vld [vmem:[%s1 + $0x1b8] sm:$0xff]
  %v148 = vld [vmem:[%s1 + $0x1c0] sm:$0xff]
  %v149 = vld [vmem:[%s1 + $0x1c8] sm:$0xff]
  %v150 = vld [vmem:[%s1 + $0x1d0] sm:$0xff]
  %v151 = vld [vmem:[%s1 + $0x1d8] sm:$0xff]
  %v152 = vld [vmem:[%s1 + $0x1e0] sm:$0xff]
  %v153 = vld [vmem:[%s1 + $0x1e8] sm:$0xff]
  %v154 = vld [vmem:[%s1 + $0x1f0] sm:$0xff]
  %v155 = vld [vmem:[%s1 + $0x1f8] sm:$0xff]
  %v220 = vunpack.c.l.b16 %v92
  %v221 = vunpack.c.h.b16 %v92
  %v222 = vunpack.c.l.b16 %v93
  %v223 = vunpack.c.h.b16 %v93
  %v224 = vunpack.c.l.b16 %v94
  %v225 = vunpack.c.h.b16 %v94
  %v226 = vunpack.c.l.b16 %v95
  %v227 = vunpack.c.h.b16 %v95
  %v228 = vunpack.c.l.b16 %v96
  %v229 = vunpack.c.h.b16 %v96
  %v230 = vunpack.c.l.b16 %v97
  %v231 = vunpack.c.h.b16 %v97
  %v232 = vunpack.c.l.b16 %v98
  %v233 = vunpack.c.h.b16 %v98
  %v234 = vunpack.c.l.b16 %v99
  %v235 = vunpack.c.h.b16 %v99
  %v236 = vunpack.c.l.b16 %v100
  %v237 = vunpack.c.h.b16 %v100
  %v238 = vunpack.c.l.b16 %v101
  %v239 = vunpack.c.h.b16 %v101
  %v240 = vunpack.c.l.b16 %v102
  %v241 = vunpack.c.h.b16 %v102
  %v242 = vunpack.c.l.b16 %v103
  %v243 = vunpack.c.h.b16 %v103
  %v244 = vunpack.c.l.b16 %v104
  %v245 = vunpack.c.h.b16 %v104
  %v246 = vunpack.c.l.b16 %v105
  %v247 = vunpack.c.h.b16 %v105
  %v248 = vunpack.c.l.b16 %v106
  %v249 = vunpack.c.h.b16 %v106
  %v250 = vunpack.c.l.b16 %v107
  %v251 = vunpack.c.h.b16 %v107
  %v252 = vunpack.c.l.b16 %v108
  %v253 = vunpack.c.h.b16 %v108
  %v254 = vunpack.c.l.b16 %v109
  %v255 = vunpack.c.h.b16 %v109
  %v256 = vunpack.c.l.b16 %v110
  %v257 = vunpack.c.h.b16 %v110
  %v258 = vunpack.c.l.b16 %v111
  %v259 = vunpack.c.h.b16 %v111
  %v260 = vunpack.c.l.b16 %v112
  %v261 = vunpack.c.h.b16 %v112
  %v262 = vunpack.c.l.b16 %v113
  %v263 = vunpack.c.h.b16 %v113
  %v264 = vunpack.c.l.b16 %v114
  %v265 = vunpack.c.h.b16 %v114
  %v266 = vunpack.c.l.b16 %v115
  %v267 = vunpack.c.h.b16 %v115
  %v268 = vunpack.c.l.b16 %v116
  %v269 = vunpack.c.h.b16 %v116
  %v270 = vunpack.c.l.b16 %v117
  %v271 = vunpack.c.h.b16 %v117
  %v272 = vunpack.c.l.b16 %v118
  %v273 = vunpack.c.h.b16 %v118
  %v274 = vunpack.c.l.b16 %v119
  %v275 = vunpack.c.h.b16 %v119
  %v276 = vunpack.c.l.b16 %v120
  %v277 = vunpack.c.h.b16 %v120
  %v278 = vunpack.c.l.b16 %v121
  %v279 = vunpack.c.h.b16 %v121
  %v280 = vunpack.c.l.b16 %v122
  %v281 = vunpack.c.h.b16 %v122
  %v282 = vunpack.c.l.b16 %v123
  %v283 = vunpack.c.h.b16 %v123
  %v284 = vunpack.c.l.b16 %v124
  %v285 = vunpack.c.h.b16 %v124
  %v286 = vunpack.c.l.b16 %v125
  %v287 = vunpack.c.h.b16 %v125
  %v288 = vunpack.c.l.b16 %v126
  %v289 = vunpack.c.h.b16 %v126
  %v290 = vunpack.c.l.b16 %v127
  %v291 = vunpack.c.h.b16 %v127
  %v292 = vunpack.c.l.b16 %v128
  %v293 = vunpack.c.h.b16 %v128
  %v294 = vunpack.c.l.b16 %v129
  %v295 = vunpack.c.h.b16 %v129
  %v296 = vunpack.c.l.b16 %v130
  %v297 = vunpack.c.h.b16 %v130
  %v298 = vunpack.c.l.b16 %v131
  %v299 = vunpack.c.h.b16 %v131
  %v300 = vunpack.c.l.b16 %v132
  %v301 = vunpack.c.h.b16 %v132
  %v302 = vunpack.c.l.b16 %v133
  %v303 = vunpack.c.h.b16 %v133
  %v304 = vunpack.c.l.b16 %v134
  %v305 = vunpack.c.h.b16 %v134
  %v306 = vunpack.c.l.b16 %v135
  %v307 = vunpack.c.h.b16 %v135
  %v308 = vunpack.c.l.b16 %v136
  %v309 = vunpack.c.h.b16 %v136
  %v310 = vunpack.c.l.b16 %v137
  %v311 = vunpack.c.h.b16 %v137
  %v312 = vunpack.c.l.b16 %v138
  %v313 = vunpack.c.h.b16 %v138
  %v314 = vunpack.c.l.b16 %v139
  %v315 = vunpack.c.h.b16 %v139
  %v316 = vunpack.c.l.b16 %v140
  %v317 = vunpack.c.h.b16 %v140
  %v318 = vunpack.c.l.b16 %v141
  %v319 = vunpack.c.h.b16 %v141
  %v320 = vunpack.c.l.b16 %v142
  %v321 = vunpack.c.h.b16 %v142
  %v322 = vunpack.c.l.b16 %v143
  %v323 = vunpack.c.h.b16 %v143
  %v324 = vunpack.c.l.b16 %v144
  %v325 = vunpack.c.h.b16 %v144
  %v326 = vunpack.c.l.b16 %v145
  %v327 = vunpack.c.h.b16 %v145
  %v328 = vunpack.c.l.b16 %v146
  %v329 = vunpack.c.h.b16 %v146
  %v330 = vunpack.c.l.b16 %v147
  %v331 = vunpack.c.h.b16 %v147
  %v332 = vunpack.c.l.b16 %v148
  %v333 = vunpack.c.h.b16 %v148
  %v334 = vunpack.c.l.b16 %v149
  %v335 = vunpack.c.h.b16 %v149
  %v336 = vunpack.c.l.b16 %v150
  %v337 = vunpack.c.h.b16 %v150
  %v338 = vunpack.c.l.b16 %v151
  %v339 = vunpack.c.h.b16 %v151
  %v340 = vunpack.c.l.b16 %v152
  %v341 = vunpack.c.h.b16 %v152
  %v342 = vunpack.c.l.b16 %v153
  %v343 = vunpack.c.h.b16 %v153
  %v344 = vunpack.c.l.b16 %v154
  %v345 = vunpack.c.h.b16 %v154
  %v346 = vunpack.c.l.b16 %v155
  %v347 = vunpack.c.h.b16 %v155
  %v348 = vpack.c.b16 %v224, %v220
  %v349 = vpack.c.b16 %v225, %v221
  %v350 = vpack.c.b16 %v226, %v222
  %v351 = vpack.c.b16 %v227, %v223
  %v352 = vpack.c.b16 %v232, %v228
  %v353 = vpack.c.b16 %v233, %v229
  %v354 = vpack.c.b16 %v234, %v230
  %v355 = vpack.c.b16 %v235, %v231
  %v356 = vpack.c.b16 %v240, %v236
  %v357 = vpack.c.b16 %v241, %v237
  %v358 = vpack.c.b16 %v242, %v238
  %v359 = vpack.c.b16 %v243, %v239
  %v360 = vpack.c.b16 %v248, %v244
  %v361 = vpack.c.b16 %v249, %v245
  %v362 = vpack.c.b16 %v250, %v246
  %v363 = vpack.c.b16 %v251, %v247
  %v364 = vpack.c.b16 %v256, %v252
  %v365 = vpack.c.b16 %v257, %v253
  %v366 = vpack.c.b16 %v258, %v254
  %v367 = vpack.c.b16 %v259, %v255
  %v368 = vpack.c.b16 %v264, %v260
  %v369 = vpack.c.b16 %v265, %v261
  %v370 = vpack.c.b16 %v266, %v262
  %v371 = vpack.c.b16 %v267, %v263
  %v372 = vpack.c.b16 %v272, %v268
  %v373 = vpack.c.b16 %v273, %v269
  %v374 = vpack.c.b16 %v274, %v270
  %v375 = vpack.c.b16 %v275, %v271
  %v376 = vpack.c.b16 %v280, %v276
  %v377 = vpack.c.b16 %v281, %v277
  %v378 = vpack.c.b16 %v282, %v278
  %v379 = vpack.c.b16 %v283, %v279
  %v380 = vpack.c.b16 %v288, %v284
  %v381 = vpack.c.b16 %v289, %v285
  %v382 = vpack.c.b16 %v290, %v286
  %v383 = vpack.c.b16 %v291, %v287
  %v384 = vpack.c.b16 %v296, %v292
  %v385 = vpack.c.b16 %v297, %v293
  %v386 = vpack.c.b16 %v298, %v294
  %v387 = vpack.c.b16 %v299, %v295
  %v388 = vpack.c.b16 %v304, %v300
  %v389 = vpack.c.b16 %v305, %v301
  %v390 = vpack.c.b16 %v306, %v302
  %v391 = vpack.c.b16 %v307, %v303
  %v392 = vpack.c.b16 %v312, %v308
  %v393 = vpack.c.b16 %v313, %v309
  %v394 = vpack.c.b16 %v314, %v310
  %v395 = vpack.c.b16 %v315, %v311
  %v396 = vpack.c.b16 %v320, %v316
  %v397 = vpack.c.b16 %v321, %v317
  %v398 = vpack.c.b16 %v322, %v318
  %v399 = vpack.c.b16 %v323, %v319
  %v400 = vpack.c.b16 %v328, %v324
  %v401 = vpack.c.b16 %v329, %v325
  %v402 = vpack.c.b16 %v330, %v326
  %v403 = vpack.c.b16 %v331, %v327
  %v404 = vpack.c.b16 %v336, %v332
  %v405 = vpack.c.b16 %v337, %v333
  %v406 = vpack.c.b16 %v338, %v334
  %v407 = vpack.c.b16 %v339, %v335
  %v408 = vpack.c.b16 %v344, %v340
  %v409 = vpack.c.b16 %v345, %v341
  %v410 = vpack.c.b16 %v346, %v342
  %v411 = vpack.c.b16 %v347, %v343
  %476 = vmatprep.subr.bf16.mxu0 %v349
  %477 = vmatpush1.bf16.msra.mxu0 %v348
  %478 = vmatprep.subr.bf16.mxu0 %v353
  %479 = vmatpush1.bf16.msra.mxu0 %v352
  %480 = vmatprep.subr.bf16.mxu0 %v357
  %481 = vmatpush1.bf16.msra.mxu0 %v356
  %482 = vmatprep.subr.bf16.mxu0 %v361
  %483 = vmatpush1.bf16.msra.mxu0 %v360
  %484 = vmatprep.subr.bf16.mxu0 %v365
  %485 = vmatpush1.bf16.msra.mxu0 %v364
  %486 = vmatprep.subr.bf16.mxu0 %v369
  %487 = vmatpush1.bf16.msra.mxu0 %v368
  %488 = vmatprep.subr.bf16.mxu0 %v373
  %489 = vmatpush1.bf16.msra.mxu0 %v372
  %490 = vmatprep.subr.bf16.mxu0 %v377
  %491 = vmatpush1.bf16.msra.mxu0 %v376
  %492 = vmatprep.subr.bf16.mxu0 %v381
  %493 = vmatpush1.bf16.msra.mxu0 %v380
  %494 = vmatprep.subr.bf16.mxu0 %v385
  %495 = vmatpush1.bf16.msra.mxu0 %v384
  %496 = vmatprep.subr.bf16.mxu0 %v389
  %497 = vmatpush1.bf16.msra.mxu0 %v388
  %498 = vmatprep.subr.bf16.mxu0 %v393
  %499 = vmatpush1.bf16.msra.mxu0 %v392
  %500 = vmatprep.subr.bf16.mxu0 %v397
  %501 = vmatpush1.bf16.msra.mxu0 %v396
  %502 = vmatprep.subr.bf16.mxu0 %v401
  %503 = vmatpush1.bf16.msra.mxu0 %v400
  %504 = vmatprep.subr.bf16.mxu0 %v405
  %505 = vmatpush1.bf16.msra.mxu0 %v404
  %506 = vmatprep.subr.bf16.mxu0 %v409
  %507 = vmatpush1.bf16.msra.mxu0 %v408
  %508 = vmatprep.mubr.bf16.mxu0 %v63
  %509 = vmatmul.mubr.bf16.gmra.mrb[0].mxu0 %v62
  %v510 = vpop.f32.mrb[0].mxu0
  %v511 = vadd.f32 0.0, %v510
  %v512 = vpop.f32.mrb[0].mxu0
  %v513 = vadd.f32 0.0, %v512
  %v514 = vpop.f32.mrb[0].mxu0
  %v515 = vadd.f32 0.0, %v514
  %v516 = vpop.f32.mrb[0].mxu0
  %v517 = vadd.f32 0.0, %v516
  %518 = vmatprep.mubr.bf16.mxu0 %v90
  %519 = vmatmul.mubr.bf16.gmra.mrb[0].mxu0 %v86
  %v520 = vpop.f32.mrb[0].mxu0
  %v521 = vadd.f32 0.0, %v520
  %v522 = vpop.f32.mrb[0].mxu0
  %v523 = vadd.f32 0.0, %v522
  %v524 = vpop.f32.mrb[0].mxu0
  %v525 = vadd.f32 0.0, %v524
  %v526 = vpop.f32.mrb[0].mxu0
  %v527 = vadd.f32 0.0, %v526
  %528 = vmatprep.mubr.bf16.mxu0 %v80
  %529 = vmatmul.mubr.bf16.gmra.mrb[0].mxu0 %v79
  %v530 = vpop.f32.mrb[0].mxu0
  %v531 = vadd.f32 0.0, %v530
  %v532 = vpop.f32.mrb[0].mxu0
  %v533 = vadd.f32 0.0, %v532
  %v534 = vpop.f32.mrb[0].mxu0
  %v535 = vadd.f32 0.0, %v534
  %v536 = vpop.f32.mrb[0].mxu0
  %v537 = vadd.f32 0.0, %v536
  %538 = vdwg.mxu0
  %539 = vmatprep.subr.bf16.mxu0 %v351
  %540 = vmatpush1.bf16.msra.mxu0 %v350
  %541 = vmatprep.subr.bf16.mxu0 %v355
  %542 = vmatpush1.bf16.msra.mxu0 %v354
  %543 = vmatprep.subr.bf16.mxu0 %v359
  %544 = vmatpush1.bf16.msra.mxu0 %v358
  %545 = vmatprep.subr.bf16.mxu0 %v363
  %546 = vmatpush1.bf16.msra.mxu0 %v362
  %547 = vmatprep.subr.bf16.mxu0 %v367
  %548 = vmatpush1.bf16.msra.mxu0 %v366
  %549 = vmatprep.subr.bf16.mxu0 %v371
  %550 = vmatpush1.bf16.msra.mxu0 %v370
  %551 = vmatprep.subr.bf16.mxu0 %v375
  %552 = vmatpush1.bf16.msra.mxu0 %v374
  %553 = vmatprep.subr.bf16.mxu0 %v379
  %554 = vmatpush1.bf16.msra.mxu0 %v378
  %555 = vmatprep.subr.bf16.mxu0 %v383
  %556 = vmatpush1.bf16.msra.mxu0 %v382
  %557 = vmatprep.subr.bf16.mxu0 %v387
  %558 = vmatpush1.bf16.msra.mxu0 %v386
  %559 = vmatprep.subr.bf16.mxu0 %v391
  %560 = vmatpush1.bf16.msra.mxu0 %v390
  %561 = vmatprep.subr.bf16.mxu0 %v395
  %562 = vmatpush1.bf16.msra.mxu0 %v394
  %563 = vmatprep.subr.bf16.mxu0 %v399
  %564 = vmatpush1.bf16.msra.mxu0 %v398
  %565 = vmatprep.subr.bf16.mxu0 %v403
  %566 = vmatpush1.bf16.msra.mxu0 %v402
  %567 = vmatprep.subr.bf16.mxu0 %v407
  %568 = vmatpush1.bf16.msra.mxu0 %v406
  %569 = vmatprep.subr.bf16.mxu0 %v411
  %570 = vmatpush1.bf16.msra.mxu0 %v410
  %571 = vmatprep.mubr.bf16.mxu0 %v63
  %572 = vmatmul.mubr.bf16.gmra.mrb[0].mxu0 %v62
  %v573 = vpop.f32.mrb[0].mxu0
  %v574 = vadd.f32 0.0, %v573
  %v575 = vpop.f32.mrb[0].mxu0
  %v576 = vadd.f32 0.0, %v575
  %v577 = vpop.f32.mrb[0].mxu0
  %v578 = vadd.f32 0.0, %v577
  %v579 = vpop.f32.mrb[0].mxu0
  %v580 = vadd.f32 0.0, %v579
  %581 = vmatprep.mubr.bf16.mxu0 %v90
  %582 = vmatmul.mubr.bf16.gmra.mrb[0].mxu0 %v86
  %v583 = vpop.f32.mrb[0].mxu0
  %v584 = vadd.f32 0.0, %v583
  %v585 = vpop.f32.mrb[0].mxu0
  %v586 = vadd.f32 0.0, %v585
  %v587 = vpop.f32.mrb[0].mxu0
  %v588 = vadd.f32 0.0, %v587
  %v589 = vpop.f32.mrb[0].mxu0
  %v590 = vadd.f32 0.0, %v589
  %591 = vmatprep.mubr.bf16.mxu0 %v80
  %592 = vmatmul.mubr.bf16.gmra.mrb[0].mxu0 %v79
  %v593 = vpop.f32.mrb[0].mxu0
  %v594 = vadd.f32 0.0, %v593
  %v595 = vpop.f32.mrb[0].mxu0
  %v596 = vadd.f32 0.0, %v595
  %v597 = vpop.f32.mrb[0].mxu0
  %v598 = vadd.f32 0.0, %v597
  %v599 = vpop.f32.mrb[0].mxu0
  %v600 = vadd.f32 0.0, %v599
  %601 = vdwg.mxu0
  %v602 = vmul.f32 %v511, %v511
  %v603 = vmul.f32 %v513, %v513
  %v604 = vmul.f32 %v515, %v515
  %v605 = vmul.f32 %v517, %v517
  %v606 = vmul.f32 %v521, %v521
  %v607 = vmul.f32 %v523, %v523
  %v608 = vmul.f32 %v525, %v525
  %v609 = vmul.f32 %v527, %v527
  %v610 = vmul.f32 %v531, %v531
  %v611 = vmul.f32 %v533, %v533
  %v612 = vmul.f32 %v535, %v535
  %v613 = vmul.f32 %v537, %v537
  %v614 = vmul.f32 %v574, %v574
  %v615 = vmul.f32 %v576, %v576
  %v616 = vmul.f32 %v578, %v578
  %v617 = vmul.f32 %v580, %v580
  %v618 = vmul.f32 %v584, %v584
  %v619 = vmul.f32 %v586, %v586
  %v620 = vmul.f32 %v588, %v588
  %v621 = vmul.f32 %v590, %v590
  %v622 = vmul.f32 %v594, %v594
  %v623 = vmul.f32 %v596, %v596
  %v624 = vmul.f32 %v598, %v598
  %v625 = vmul.f32 %v600, %v600
  %v626 = vadd.f32 %v602, %v614
  %v627 = vadd.f32 %v603, %v615
  %v628 = vadd.f32 %v604, %v616
  %v629 = vadd.f32 %v605, %v617
  %v630 = vadd.f32 %v606, %v618
  %v631 = vadd.f32 %v607, %v619
  %v632 = vadd.f32 %v608, %v620
  %v633 = vadd.f32 %v609, %v621
  %v634 = vadd.f32 %v610, %v622
  %v635 = vadd.f32 %v611, %v623
  %v636 = vadd.f32 %v612, %v624
  %v637 = vadd.f32 %v613, %v625
  %v638 = vpack.c.bf16 %v628, %v626
  %v639 = vpack.c.bf16 %v629, %v627
  %v640 = vpack.c.bf16 %v632, %v630
  %v641 = vpack.c.bf16 %v633, %v631
  %v642 = vpack.c.bf16 %v636, %v634
  %v643 = vpack.c.bf16 %v637, %v635
  %v644 = vld [vmem:[%s2] sm:$0xf]
  %v645 = vld [vmem:[%s2 + $0x4] sm:$0xf]
  %v646 = vld [vmem:[%s2 + $0x8] sm:$0xf]
  %v647 = vld [vmem:[%s2 + $0xc] sm:$0xf]
  %v648 = vld [vmem:[%s2 + $0x10] sm:$0xf]
  %v649 = vld [vmem:[%s2 + $0x14] sm:$0xf]
  %v650 = vld [vmem:[%s2 + $0x18] sm:$0xf]
  %v651 = vld [vmem:[%s2 + $0x1c] sm:$0xf]
  %v652 = vld [vmem:[%s2 + $0x20] sm:$0xf]
  %v653 = vld [vmem:[%s2 + $0x24] sm:$0xf]
  %v654 = vld [vmem:[%s2 + $0x28] sm:$0xf]
  %v655 = vld [vmem:[%s2 + $0x2c] sm:$0xf]
  %v656 = vld [vmem:[%s2 + $0x30] sm:$0xf]
  %v657 = vld [vmem:[%s2 + $0x34] sm:$0xf]
  %v658 = vld [vmem:[%s2 + $0x38] sm:$0xf]
  %v659 = vld [vmem:[%s2 + $0x3c] sm:$0xf]
  %v660 = vld [vmem:[%s2 + $0x40] sm:$0xf]
  %v661 = vld [vmem:[%s2 + $0x44] sm:$0xf]
  %v662 = vld [vmem:[%s2 + $0x48] sm:$0xf]
  %v663 = vld [vmem:[%s2 + $0x4c] sm:$0xf]
  %v664 = vld [vmem:[%s2 + $0x50] sm:$0xf]
  %v665 = vld [vmem:[%s2 + $0x54] sm:$0xf]
  %v666 = vld [vmem:[%s2 + $0x58] sm:$0xf]
  %v667 = vld [vmem:[%s2 + $0x5c] sm:$0xf]
  %v668 = vld [vmem:[%s2 + $0x60] sm:$0xf]
  %v669 = vld [vmem:[%s2 + $0x64] sm:$0xf]
  %v670 = vld [vmem:[%s2 + $0x68] sm:$0xf]
  %v671 = vld [vmem:[%s2 + $0x6c] sm:$0xf]
  %v672 = vld [vmem:[%s2 + $0x70] sm:$0xf]
  %v673 = vld [vmem:[%s2 + $0x74] sm:$0xf]
  %v674 = vld [vmem:[%s2 + $0x78] sm:$0xf]
  %v675 = vld [vmem:[%s2 + $0x7c] sm:$0xf]
  %v708 = vunpack.c.l.b16 %v644
  %v709 = vunpack.c.l.b16 %v645
  %v710 = vunpack.c.l.b16 %v646
  %v711 = vunpack.c.l.b16 %v647
  %v712 = vunpack.c.l.b16 %v648
  %v713 = vunpack.c.l.b16 %v649
  %v714 = vunpack.c.l.b16 %v650
  %v715 = vunpack.c.l.b16 %v651
  %v716 = vunpack.c.l.b16 %v652
  %v717 = vunpack.c.l.b16 %v653
  %v718 = vunpack.c.l.b16 %v654
  %v719 = vunpack.c.l.b16 %v655
  %v720 = vunpack.c.l.b16 %v656
  %v721 = vunpack.c.l.b16 %v657
  %v722 = vunpack.c.l.b16 %v658
  %v723 = vunpack.c.l.b16 %v659
  %v724 = vunpack.c.l.b16 %v660
  %v725 = vunpack.c.l.b16 %v661
  %v726 = vunpack.c.l.b16 %v662
  %v727 = vunpack.c.l.b16 %v663
  %v728 = vunpack.c.l.b16 %v664
  %v729 = vunpack.c.l.b16 %v665
  %v730 = vunpack.c.l.b16 %v666
  %v731 = vunpack.c.l.b16 %v667
  %v732 = vunpack.c.l.b16 %v668
  %v733 = vunpack.c.l.b16 %v669
  %v734 = vunpack.c.l.b16 %v670
  %v735 = vunpack.c.l.b16 %v671
  %v736 = vunpack.c.l.b16 %v672
  %v737 = vunpack.c.l.b16 %v673
  %v738 = vunpack.c.l.b16 %v674
  %v739 = vunpack.c.l.b16 %v675
  %v740 = vpack.c.b16 %v709, %v708
  %v741 = vpack.c.b16 %v711, %v710
  %v742 = vpack.c.b16 %v713, %v712
  %v743 = vpack.c.b16 %v715, %v714
  %v744 = vpack.c.b16 %v717, %v716
  %v745 = vpack.c.b16 %v719, %v718
  %v746 = vpack.c.b16 %v721, %v720
  %v747 = vpack.c.b16 %v723, %v722
  %v748 = vpack.c.b16 %v725, %v724
  %v749 = vpack.c.b16 %v727, %v726
  %v750 = vpack.c.b16 %v729, %v728
  %v751 = vpack.c.b16 %v731, %v730
  %v752 = vpack.c.b16 %v733, %v732
  %v753 = vpack.c.b16 %v735, %v734
  %v754 = vpack.c.b16 %v737, %v736
  %v755 = vpack.c.b16 %v739, %v738
  %772 = vmatprep.subr.bf16.mxu0 0
  %773 = vmatpush1.bf16.msra.mxu0 %v740
  %774 = vmatprep.subr.bf16.mxu0 0
  %775 = vmatpush1.bf16.msra.mxu0 %v741
  %776 = vmatprep.subr.bf16.mxu0 0
  %777 = vmatpush1.bf16.msra.mxu0 %v742
  %778 = vmatprep.subr.bf16.mxu0 0
  %779 = vmatpush1.bf16.msra.mxu0 %v743
  %780 = vmatprep.subr.bf16.mxu0 0
  %781 = vmatpush1.bf16.msra.mxu0 %v744
  %782 = vmatprep.subr.bf16.mxu0 0
  %783 = vmatpush1.bf16.msra.mxu0 %v745
  %784 = vmatprep.subr.bf16.mxu0 0
  %785 = vmatpush1.bf16.msra.mxu0 %v746
  %786 = vmatprep.subr.bf16.mxu0 0
  %787 = vmatpush1.bf16.msra.mxu0 %v747
  %788 = vmatprep.subr.bf16.mxu0 0
  %789 = vmatpush1.bf16.msra.mxu0 %v748
  %790 = vmatprep.subr.bf16.mxu0 0
  %791 = vmatpush1.bf16.msra.mxu0 %v749
  %792 = vmatprep.subr.bf16.mxu0 0
  %793 = vmatpush1.bf16.msra.mxu0 %v750
  %794 = vmatprep.subr.bf16.mxu0 0
  %795 = vmatpush1.bf16.msra.mxu0 %v751
  %796 = vmatprep.subr.bf16.mxu0 0
  %797 = vmatpush1.bf16.msra.mxu0 %v752
  %798 = vmatprep.subr.bf16.mxu0 0
  %799 = vmatpush1.bf16.msra.mxu0 %v753
  %800 = vmatprep.subr.bf16.mxu0 0
  %801 = vmatpush1.bf16.msra.mxu0 %v754
  %802 = vmatprep.subr.bf16.mxu0 0
  %803 = vmatpush1.bf16.msra.mxu0 %v755
  %804 = vmatprep.mubr.bf16.mxu0 %v639
  %805 = vmatmul.mubr.bf16.gmra.mrb[0].mxu0 %v638
  %v806 = vpop.f32.mrb[0].mxu0
  %v807 = vadd.f32 1e-05, %v806
  %v808 = vpop.f32.mrb[0].mxu0
  %v809 = vpop.f32.mrb[0].mxu0
  %v810 = vadd.f32 1e-05, %v809
  %v811 = vpop.f32.mrb[0].mxu0
  %812 = vmatprep.mubr.bf16.mxu0 %v641
  %813 = vmatmul.mubr.bf16.gmra.mrb[0].mxu0 %v640
  %v814 = vpop.f32.mrb[0].mxu0
  %v815 = vadd.f32 1e-05, %v814
  %v816 = vpop.f32.mrb[0].mxu0
  %v817 = vpop.f32.mrb[0].mxu0
  %v818 = vadd.f32 1e-05, %v817
  %v819 = vpop.f32.mrb[0].mxu0
  %820 = vmatprep.mubr.bf16.mxu0 %v643
  %821 = vmatmul.mubr.bf16.gmra.mrb[0].mxu0 %v642
  %v822 = vpop.f32.mrb[0].mxu0
  %v823 = vadd.f32 1e-05, %v822
  %v824 = vpop.f32.mrb[0].mxu0
  %v825 = vpop.f32.mrb[0].mxu0
  %v826 = vadd.f32 1e-05, %v825
  %v827 = vpop.f32.mrb[0].mxu0
  %828 = vdwg.mxu0
  %v829 = vlog2.pop %v807
  %v830 = vmul.f32 %v829, 0.6931472
  %v831 = vlog2.pop %v810
  %v832 = vmul.f32 %v831, 0.6931472
  %v833 = vlog2.pop %v815
  %v834 = vmul.f32 %v833, 0.6931472
  %v835 = vlog2.pop %v818
  %v836 = vmul.f32 %v835, 0.6931472
  %v837 = vlog2.pop %v823
  %v838 = vmul.f32 %v837, 0.6931472
  %v839 = vlog2.pop %v826
  %v840 = vmul.f32 %v839, 0.6931472
  %v841 = vadd.f32 %v830, 4.0
  %v842 = vadd.f32 %v832, 4.0
  %v843 = vadd.f32 %v834, 4.0
  %v844 = vadd.f32 %v836, 4.0
  %v845 = vadd.f32 %v838, 4.0
  %v846 = vadd.f32 %v840, 4.0
  %v847 = vmul.f32 %v841, 0.25
  %v848 = vmul.f32 %v842, 0.25
  %v849 = vmul.f32 %v843, 0.25
  %v850 = vmul.f32 %v844, 0.25
  %v851 = vmul.f32 %v845, 0.25
  %v852 = vmul.f32 %v846, 0.25
  %s853 = sadd.s32 0, 0
  %s854 = smul.u32 %s853, 24
  %v855 = vlaneseq
  %v856 = vshrl.u32 %v855, 7
  %v857 = vadd.s32 %v856, 8
  %v858 = vadd.s32 %v856, 16
  %v859 = vstv %s854
  %v860 = vadd.s32 %v859, %v856
  %v861 = vadd.s32 %v859, %v857
  %v862 = vadd.s32 %v859, %v858
  %v863 = vlaneseq
  %v864 = vand.u32 %v863, 127
  %vm865 = vcmp.lt.s32.totalorder %v860, 18
  %vm866 = vcmp.lt.s32.totalorder %v861, 18
  %vm867 = vcmp.lt.s32.totalorder %v862, 18
  %vm868 = vcmp.lt.s32.totalorder %v864, 16
  %vm869 = vmand %vm865, %vm868
  %vm870 = vmand %vm866, %vm868
  %vm871 = vmand %vm867, %vm868
  %v872 = vsel %vm869, 1, 0
  %v873 = vsel %vm870, 1, 0
  %v874 = vsel %vm871, 1, 0
  %v875 = vcvt.s32.f32 %v872
  %v876 = vcvt.s32.f32 %v873
  %v877 = vcvt.s32.f32 %v874
  %v878 = vsub.f32 %v850, %v847
  %v879 = vsub.f32 %v851, %v848
  %v880 = vsub.f32 %v852, %v849
  %v881 = vand.u32 2147483647, %v878
  %v882 = vand.u32 2147483647, %v879
  %v883 = vand.u32 2147483647, %v880
  %v884 = vmul.f32 %v881, %v875
  %v885 = vmul.f32 %v882, %v876
  %v886 = vmul.f32 %v883, %v877
  %v887 = vand.u32 2147483647, %v850
  %v888 = vand.u32 2147483647, %v851
  %v889 = vand.u32 2147483647, %v852
  %v890 = vmul.f32 %v887, %v875
  %v891 = vmul.f32 %v888, %v876
  %v892 = vmul.f32 %v889, %v877
  %v893 = vadd.f32 %v884, %v885
  %v894 = vadd.f32 %v893, %v886
  %v895 = vadd.f32 %v890, %v891
  %v896 = vadd.f32 %v895, %v892
  %v897 = vld [vmem:[%s3] sm:$0xff]
  %v898 = vadd.f32 %v897, %v894
  %899 = vst [vmem:[%s3] sm:$0xff] %v898
  %s900 = scalar_lea.vmem %s3, 8
  %v901 = vld [vmem:[%s900] sm:$0xff]
  %v902 = vadd.f32 %v901, %v896
  %903 = vst [vmem:[%s900] sm:$0xff] %v902
  // Predicated region
  $region18: #{_forward_impl.4} parent=0 // pred_check
    _
  $region19: #{_forward_impl.4} parent=0 // pred_check_branch
    %905 = sbr.rel (0) target = $region21
  $region20: #{_forward_impl.4} parent=0 // pred_region
    _
  $region21: #{_forward_impl.4} parent=0 // pred_fallthru
    _
  // Predicated region
  $region22: #{_forward_impl.4} parent=0 // pred_check
    _
  $region23: #{_forward_impl.4} parent=0 // pred_check_branch
    %907 = sbr.rel (0) target = $region25
  $region24: #{_forward_impl.4} parent=0 // pred_region
    _
  $region25: #{_forward_impl.4} parent=0 // pred_fallthru
    _

// kernel: _forward_impl.3
$region0: #{_forward_impl.3}
  #allocation0 [shape = 'u32[]', space=smem, size = 0x4, offset = 0x4, fixed_abs, tag = 'smem constant byte address 0x4 - core index']
  #allocation1 [shape = 'u32[144,128]{1,0:T(1,128)}', space=vmem, size = 0x12000, scoped, tag = 'internal scratch']
  %s0 = inlined_call_operand.vmem [shape: bf16[2,40,128], index: 0, kind: input, shape index: {}]
  %s1 = inlined_call_operand.vmem [shape: bf16[128,256], index: 1, kind: input, shape index: {}]
  %s2 = inlined_call_operand.vmem [shape: bf16[128,128], index: 2, kind: input, shape index: {}]
  %s3 = inlined_call_operand.vmem [shape: f32[1,2,8,128], index: 3, kind: output, shape index: {}]
  %s4 = sld [smem:[#allocation0]]
  $region26: #{_forward_impl.3} parent=0
    _
  %s6 = ssub.s32 1, %s4
  %s7 = scalar_select 0, %s6, %s4
  // Predicated region
  $region2: #{_forward_impl.3} parent=0 // pred_check
    _
  $region3: #{_forward_impl.3} parent=0 // pred_check_branch
    %9 = sbr.rel (0) target = $region5
  $region4: #{_forward_impl.3} parent=0 // pred_region
    %s10 = sadd.s32 0, 0
    %s11 = smul.u32 5, %s10
    %p12 = scmp.lt.s32.totalorder %s11, 4
    %s13 = scalar_select %p12, %s11, 4
    %s14 = smul.addr %s13, 4
    %s15 = scalar_lea.vmem %s0, %s14
    %s16 = sadd.s32 0, 0
    %s17 = smul.u32 5, %s16
  $region5: #{_forward_impl.3} parent=0 // pred_fallthru
    _
  // Predicated region
  $region6: #{_forward_impl.3} parent=0 // pred_check
    _
  $region7: #{_forward_impl.3} parent=0 // pred_check_branch
    %19 = sbr.rel (0) target = $region9
  $region8: #{_forward_impl.3} parent=0 // pred_region
    _
  $region9: #{_forward_impl.3} parent=0 // pred_fallthru
    _
  // Predicated region
  $region10: #{_forward_impl.3} parent=0 // pred_check
    _
  $region11: #{_forward_impl.3} parent=0 // pred_check_branch
    %21 = sbr.rel (0) target = $region13
  $region12: #{_forward_impl.3} parent=0 // pred_region
    _
  $region13: #{_forward_impl.3} parent=0 // pred_fallthru
    _
  %s22 = sadd.s32 0, 0
  %s23 = smul.u32 5, %s22
  %p24 = scmp.lt.s32.totalorder %s23, 4
  %s25 = scalar_select %p24, %s23, 4
  %s26 = smul.addr %s25, 4
  %s27 = scalar_lea.vmem %s0, %s26
  %s28 = sadd.s32 0, 0
  %s29 = smul.u32 5, %s28
  %p30 = scmp.lt.s32.totalorder %s29, 4
  %s31 = scalar_select %p30, %s29, 4
  %s32 = smul.addr %s31, 4
  %s33 = scalar_lea.vmem %s0, %s32
  %s34 = sadd.s32 0, 0
  %s35 = smul.u32 5, %s34
  %p37 = scmp.eq.s32.totalorder 0, 0
  // Predicated region
  $region14: #{_forward_impl.3} parent=0 // pred_check
    %p38 = pneg %p37
  $region15: #{_forward_impl.3} parent=0 // pred_check_branch
    %40 = sbr.rel (%p38) target = $region17
  $region16: #{_forward_impl.3} parent=0 // pred_region
    %41 = vst [vmem:[%s3] sm:$0xff] 0.0
    %42 = vst [vmem:[%s3 + $0x8] sm:$0xff] 0.0
  $region17: #{_forward_impl.3} parent=0 // pred_fallthru
    _
  %v43 = vld [vmem:[%s33] sm:$0xf]
  %v44 = vld [vmem:[%s33 + $0x4] sm:$0xf]
  %v45 = vld [vmem:[%s33 + $0x8] sm:$0xf]
  %v46 = vld [vmem:[%s33 + $0xc] sm:$0xf]
  %v47 = vld [vmem:[%s33 + $0x10] sm:$0xf]
  %s48 = scalar_lea.vmem %s33, 20
  %v49 = vld [vmem:[%s48] sm:$0xf]
  %v50 = vld [vmem:[%s48 + $0x4] sm:$0xf]
  %v51 = vld [vmem:[%s48 + $0x8] sm:$0xf]
  %v52 = vld [vmem:[%s48 + $0xc] sm:$0xf]
  %v53 = vld [vmem:[%s48 + $0x10] sm:$0xf]
  %v59 = vunpack.c.l.b16 %v43
  %v60 = vunpack.c.l.b16 %v44
  %v61 = vunpack.c.l.b16 %v45
  %v62 = vunpack.c.l.b16 %v46
  %v63 = vunpack.c.l.b16 %v47
  %v64 = vpack.c.b16 %v60, %v59
  %v65 = vpack.c.b16 %v62, %v61
  %v66 = vpack.c.b16 %v63, %v63
  %v74 = vunpack.c.l.b16 %v49
  %v75 = vunpack.c.l.b16 %v50
  %v76 = vunpack.c.l.b16 %v51
  %v77 = vunpack.c.l.b16 %v52
  %v78 = vunpack.c.l.b16 %v53
  %v79 = vpack.c.b16 %v74, %v74
  %v80 = vpack.c.b16 %v76, %v75
  %v81 = vpack.c.b16 %v78, %v77
  %vm84 = vcmask 1043456
  %v87 = vsel %vm84, %v66, %v79
  %v89 = vld [vmem:[%s1] sm:$0xff]
  %v90 = vld [vmem:[%s1 + $0x8] sm:$0xff]
  %v91 = vld [vmem:[%s1 + $0x10] sm:$0xff]
  %v92 = vld [vmem:[%s1 + $0x18] sm:$0xff]
  %v93 = vld [vmem:[%s1 + $0x20] sm:$0xff]
  %v94 = vld [vmem:[%s1 + $0x28] sm:$0xff]
  %v95 = vld [vmem:[%s1 + $0x30] sm:$0xff]
  %v96 = vld [vmem:[%s1 + $0x38] sm:$0xff]
  %v97 = vld [vmem:[%s1 + $0x40] sm:$0xff]
  %v98 = vld [vmem:[%s1 + $0x48] sm:$0xff]
  %v99 = vld [vmem:[%s1 + $0x50] sm:$0xff]
  %v100 = vld [vmem:[%s1 + $0x58] sm:$0xff]
  %v101 = vld [vmem:[%s1 + $0x60] sm:$0xff]
  %v102 = vld [vmem:[%s1 + $0x68] sm:$0xff]
  %v103 = vld [vmem:[%s1 + $0x70] sm:$0xff]
  %v104 = vld [vmem:[%s1 + $0x78] sm:$0xff]
  %v121 = vunpack.c.l.b16 %v89
  %v122 = vunpack.c.h.b16 %v89
  %v123 = vunpack.c.l.b16 %v90
  %v124 = vunpack.c.h.b16 %v90
  %v125 = vunpack.c.l.b16 %v91
  %v126 = vunpack.c.h.b16 %v91
  %v127 = vunpack.c.l.b16 %v92
  %v128 = vunpack.c.h.b16 %v92
  %v129 = vunpack.c.l.b16 %v93
  %v130 = vunpack.c.h.b16 %v93
  %v131 = vunpack.c.l.b16 %v94
  %v132 = vunpack.c.h.b16 %v94
  %v133 = vunpack.c.l.b16 %v95
  %v134 = vunpack.c.h.b16 %v95
  %v135 = vunpack.c.l.b16 %v96
  %v136 = vunpack.c.h.b16 %v96
  %v137 = vunpack.c.l.b16 %v97
  %v138 = vunpack.c.h.b16 %v97
  %v139 = vunpack.c.l.b16 %v98
  %v140 = vunpack.c.h.b16 %v98
  %v141 = vunpack.c.l.b16 %v99
  %v142 = vunpack.c.h.b16 %v99
  %v143 = vunpack.c.l.b16 %v100
  %v144 = vunpack.c.h.b16 %v100
  %v145 = vunpack.c.l.b16 %v101
  %v146 = vunpack.c.h.b16 %v101
  %v147 = vunpack.c.l.b16 %v102
  %v148 = vunpack.c.h.b16 %v102
  %v149 = vunpack.c.l.b16 %v103
  %v150 = vunpack.c.h.b16 %v103
  %v151 = vunpack.c.l.b16 %v104
  %v152 = vunpack.c.h.b16 %v104
  %v153 = vpack.c.b16 %v123, %v121
  %v154 = vpack.c.b16 %v124, %v122
  %v155 = vpack.c.b16 %v127, %v125
  %v156 = vpack.c.b16 %v128, %v126
  %v157 = vpack.c.b16 %v131, %v129
  %v158 = vpack.c.b16 %v132, %v130
  %v159 = vpack.c.b16 %v135, %v133
  %v160 = vpack.c.b16 %v136, %v134
  %v161 = vpack.c.b16 %v139, %v137
  %v162 = vpack.c.b16 %v140, %v138
  %v163 = vpack.c.b16 %v143, %v141
  %v164 = vpack.c.b16 %v144, %v142
  %v165 = vpack.c.b16 %v147, %v145
  %v166 = vpack.c.b16 %v148, %v146
  %v167 = vpack.c.b16 %v151, %v149
  %v168 = vpack.c.b16 %v152, %v150
  %185 = vmatprep.subr.bf16.mxu0 %v154
  %186 = vmatpush1.bf16.msra.mxu0 %v153
  %187 = vmatprep.subr.bf16.mxu0 %v156
  %188 = vmatpush1.bf16.msra.mxu0 %v155
  %189 = vmatprep.subr.bf16.mxu0 %v158
  %190 = vmatpush1.bf16.msra.mxu0 %v157
  %191 = vmatprep.subr.bf16.mxu0 %v160
  %192 = vmatpush1.bf16.msra.mxu0 %v159
  %193 = vmatprep.subr.bf16.mxu0 %v162
  %194 = vmatpush1.bf16.msra.mxu0 %v161
  %195 = vmatprep.subr.bf16.mxu0 %v164
  %196 = vmatpush1.bf16.msra.mxu0 %v163
  %197 = vmatprep.subr.bf16.mxu0 %v166
  %198 = vmatpush1.bf16.msra.mxu0 %v165
  %199 = vmatprep.subr.bf16.mxu0 %v168
  %200 = vmatpush1.bf16.msra.mxu0 %v167
  %201 = vmatprep.subr.bf16.mxu0 0
  %202 = vmatpush1.bf16.msra.mxu0 0
  %203 = vmatprep.subr.bf16.mxu0 0
  %204 = vmatpush1.bf16.msra.mxu0 0
  %205 = vmatprep.subr.bf16.mxu0 0
  %206 = vmatpush1.bf16.msra.mxu0 0
  %207 = vmatprep.subr.bf16.mxu0 0
  %208 = vmatpush1.bf16.msra.mxu0 0
  %209 = vmatprep.subr.bf16.mxu0 0
  %210 = vmatpush1.bf16.msra.mxu0 0
  %211 = vmatprep.subr.bf16.mxu0 0
  %212 = vmatpush1.bf16.msra.mxu0 0
  %213 = vmatprep.subr.bf16.mxu0 0
  %214 = vmatpush1.bf16.msra.mxu0 0
  %215 = vmatprep.subr.bf16.mxu0 0
  %216 = vmatpush1.bf16.msra.mxu0 0
  %217 = vmatprep.mubr.bf16.mxu0 0
  %218 = vmatmul.mubr.bf16.gmra.mrb[0].mxu0 %v64
  %v219 = vpop.f32.mrb[0].mxu0
  %v220 = vadd.f32 0.0, %v219
  %v221 = vpop.f32.mrb[0].mxu0
  %v222 = vadd.f32 0.0, %v221
  %v223 = vpop.f32.mrb[0].mxu0
  %v224 = vadd.f32 0.0, %v223
  %v225 = vpop.f32.mrb[0].mxu0
  %v226 = vadd.f32 0.0, %v225
  %227 = vmatprep.mubr.bf16.mxu0 0
  %228 = vmatmul.mubr.bf16.gmra.mrb[0].mxu0 %v65
  %v229 = vpop.f32.mrb[0].mxu0
  %v230 = vadd.f32 0.0, %v229
  %v231 = vpop.f32.mrb[0].mxu0
  %v232 = vadd.f32 0.0, %v231
  %v233 = vpop.f32.mrb[0].mxu0
  %v234 = vadd.f32 0.0, %v233
  %v235 = vpop.f32.mrb[0].mxu0
  %v236 = vadd.f32 0.0, %v235
  %237 = vmatprep.mubr.bf16.mxu0 0
  %238 = vmatmul.mubr.bf16.gmra.mrb[0].mxu0 %v87
  %v239 = vpop.f32.mrb[0].mxu0
  %v240 = vadd.f32 0.0, %v239
  %v241 = vpop.f32.mrb[0].mxu0
  %v242 = vadd.f32 0.0, %v241
  %v243 = vpop.f32.mrb[0].mxu0
  %v244 = vadd.f32 0.0, %v243
  %v245 = vpop.f32.mrb[0].mxu0
  %v246 = vadd.f32 0.0, %v245
  %247 = vmatprep.mubr.bf16.mxu0 0
  %248 = vmatmul.mubr.bf16.gmra.mrb[0].mxu0 %v80
  %v249 = vpop.f32.mrb[0].mxu0
  %v250 = vadd.f32 0.0, %v249
  %v251 = vpop.f32.mrb[0].mxu0
  %v252 = vadd.f32 0.0, %v251
  %v253 = vpop.f32.mrb[0].mxu0
  %v254 = vadd.f32 0.0, %v253
  %v255 = vpop.f32.mrb[0].mxu0
  %v256 = vadd.f32 0.0, %v255
  %257 = vmatprep.mubr.bf16.mxu0 0
  %258 = vmatmul.mubr.bf16.gmra.mrb[0].mxu0 %v81
  %v259 = vpop.f32.mrb[0].mxu0
  %v260 = vadd.f32 0.0, %v259
  %v261 = vpop.f32.mrb[0].mxu0
  %v262 = vadd.f32 0.0, %v261
  %v263 = vpop.f32.mrb[0].mxu0
  %v264 = vadd.f32 0.0, %v263
  %v265 = vpop.f32.mrb[0].mxu0
  %v266 = vadd.f32 0.0, %v265
  %267 = vdwg.mxu0
  %v268 = vmul.f32 %v220, %v220
  %v269 = vmul.f32 %v224, %v224
  %v270 = vmul.f32 %v230, %v230
  %v271 = vmul.f32 %v234, %v234
  %v272 = vmul.f32 %v240, %v240
  %v273 = vmul.f32 %v244, %v244
  %v274 = vmul.f32 %v250, %v250
  %v275 = vmul.f32 %v254, %v254
  %v276 = vmul.f32 %v260, %v260
  %v277 = vmul.f32 %v264, %v264
  %v278 = vmul.f32 %v222, %v222
  %v279 = vmul.f32 %v226, %v226
  %v280 = vmul.f32 %v232, %v232
  %v281 = vmul.f32 %v236, %v236
  %v282 = vmul.f32 %v242, %v242
  %v283 = vmul.f32 %v246, %v246
  %v284 = vmul.f32 %v252, %v252
  %v285 = vmul.f32 %v256, %v256
  %v286 = vmul.f32 %v262, %v262
  %v287 = vmul.f32 %v266, %v266
  %v288 = vadd.f32 %v268, %v278
  %v289 = vadd.f32 %v269, %v279
  %v290 = vadd.f32 %v270, %v280
  %v291 = vadd.f32 %v271, %v281
  %v292 = vadd.f32 %v272, %v282
  %v293 = vadd.f32 %v273, %v283
  %v294 = vadd.f32 %v274, %v284
  %v295 = vadd.f32 %v275, %v285
  %v296 = vadd.f32 %v276, %v286
  %v297 = vadd.f32 %v277, %v287
  %v298 = vpack.c.bf16 %v289, %v288
  %v299 = vpack.c.bf16 %v291, %v290
  %v300 = vpack.c.bf16 %v293, %v292
  %v301 = vpack.c.bf16 %v295, %v294
  %v302 = vpack.c.bf16 %v297, %v296
  %v303 = vld [vmem:[%s2] sm:$0xf]
  %v304 = vld [vmem:[%s2 + $0x4] sm:$0xf]
  %v305 = vld [vmem:[%s2 + $0x8] sm:$0xf]
  %v306 = vld [vmem:[%s2 + $0xc] sm:$0xf]
  %v307 = vld [vmem:[%s2 + $0x10] sm:$0xf]
  %v308 = vld [vmem:[%s2 + $0x14] sm:$0xf]
  %v309 = vld [vmem:[%s2 + $0x18] sm:$0xf]
  %v310 = vld [vmem:[%s2 + $0x1c] sm:$0xf]
  %v311 = vld [vmem:[%s2 + $0x20] sm:$0xf]
  %v312 = vld [vmem:[%s2 + $0x24] sm:$0xf]
  %v313 = vld [vmem:[%s2 + $0x28] sm:$0xf]
  %v314 = vld [vmem:[%s2 + $0x2c] sm:$0xf]
  %v315 = vld [vmem:[%s2 + $0x30] sm:$0xf]
  %v316 = vld [vmem:[%s2 + $0x34] sm:$0xf]
  %v317 = vld [vmem:[%s2 + $0x38] sm:$0xf]
  %v318 = vld [vmem:[%s2 + $0x3c] sm:$0xf]
  %v335 = vunpack.c.l.b16 %v303
  %v336 = vunpack.c.l.b16 %v304
  %v337 = vunpack.c.l.b16 %v305
  %v338 = vunpack.c.l.b16 %v306
  %v339 = vunpack.c.l.b16 %v307
  %v340 = vunpack.c.l.b16 %v308
  %v341 = vunpack.c.l.b16 %v309
  %v342 = vunpack.c.l.b16 %v310
  %v343 = vunpack.c.l.b16 %v311
  %v344 = vunpack.c.l.b16 %v312
  %v345 = vunpack.c.l.b16 %v313
  %v346 = vunpack.c.l.b16 %v314
  %v347 = vunpack.c.l.b16 %v315
  %v348 = vunpack.c.l.b16 %v316
  %v349 = vunpack.c.l.b16 %v317
  %v350 = vunpack.c.l.b16 %v318
  %v351 = vpack.c.b16 %v336, %v335
  %v352 = vpack.c.b16 %v338, %v337
  %v353 = vpack.c.b16 %v340, %v339
  %v354 = vpack.c.b16 %v342, %v341
  %v355 = vpack.c.b16 %v344, %v343
  %v356 = vpack.c.b16 %v346, %v345
  %v357 = vpack.c.b16 %v348, %v347
  %v358 = vpack.c.b16 %v350, %v349
  %367 = vmatprep.subr.bf16.mxu0 0
  %368 = vmatpush1.bf16.msra.mxu0 %v351
  %369 = vmatprep.subr.bf16.mxu0 0
  %370 = vmatpush1.bf16.msra.mxu0 %v352
  %371 = vmatprep.subr.bf16.mxu0 0
  %372 = vmatpush1.bf16.msra.mxu0 %v353
  %373 = vmatprep.subr.bf16.mxu0 0
  %374 = vmatpush1.bf16.msra.mxu0 %v354
  %375 = vmatprep.subr.bf16.mxu0 0
  %376 = vmatpush1.bf16.msra.mxu0 %v355
  %377 = vmatprep.subr.bf16.mxu0 0
  %378 = vmatpush1.bf16.msra.mxu0 %v356
  %379 = vmatprep.subr.bf16.mxu0 0
  %380 = vmatpush1.bf16.msra.mxu0 %v357
  %381 = vmatprep.subr.bf16.mxu0 0
  %382 = vmatpush1.bf16.msra.mxu0 %v358
  %383 = vmatprep.subr.bf16.mxu0 0
  %384 = vmatpush1.bf16.msra.mxu0 0
  %385 = vmatprep.subr.bf16.mxu0 0
  %386 = vmatpush1.bf16.msra.mxu0 0
  %387 = vmatprep.subr.bf16.mxu0 0
  %388 = vmatpush1.bf16.msra.mxu0 0
  %389 = vmatprep.subr.bf16.mxu0 0
  %390 = vmatpush1.bf16.msra.mxu0 0
  %391 = vmatprep.subr.bf16.mxu0 0
  %392 = vmatpush1.bf16.msra.mxu0 0
  %393 = vmatprep.subr.bf16.mxu0 0
  %394 = vmatpush1.bf16.msra.mxu0 0
  %395 = vmatprep.subr.bf16.mxu0 0
  %396 = vmatpush1.bf16.msra.mxu0 0
  %397 = vmatprep.subr.bf16.mxu0 0
  %398 = vmatpush1.bf16.msra.mxu0 0
  %399 = vmatprep.mubr.bf16.mxu0 0
  %400 = vmatmul.mubr.bf16.gmra.mrb[0].mxu0 %v298
  %v401 = vpop.f32.mrb[0].mxu0
  %v402 = vadd.f32 1e-05, %v401
  %v403 = vpop.f32.mrb[0].mxu0
  %v404 = vpop.f32.mrb[0].mxu0
  %v405 = vadd.f32 1e-05, %v404
  %v406 = vpop.f32.mrb[0].mxu0
  %407 = vmatprep.mubr.bf16.mxu0 0
  %408 = vmatmul.mubr.bf16.gmra.mrb[0].mxu0 %v299
  %v409 = vpop.f32.mrb[0].mxu0
  %v410 = vadd.f32 1e-05, %v409
  %v411 = vpop.f32.mrb[0].mxu0
  %v412 = vpop.f32.mrb[0].mxu0
  %v413 = vadd.f32 1e-05, %v412
  %v414 = vpop.f32.mrb[0].mxu0
  %415 = vmatprep.mubr.bf16.mxu0 0
  %416 = vmatmul.mubr.bf16.gmra.mrb[0].mxu0 %v300
  %v417 = vpop.f32.mrb[0].mxu0
  %v418 = vadd.f32 1e-05, %v417
  %v419 = vpop.f32.mrb[0].mxu0
  %v420 = vpop.f32.mrb[0].mxu0
  %v421 = vadd.f32 1e-05, %v420
  %v422 = vpop.f32.mrb[0].mxu0
  %423 = vmatprep.mubr.bf16.mxu0 0
  %424 = vmatmul.mubr.bf16.gmra.mrb[0].mxu0 %v301
  %v425 = vpop.f32.mrb[0].mxu0
  %v426 = vadd.f32 1e-05, %v425
  %v427 = vpop.f32.mrb[0].mxu0
  %v428 = vpop.f32.mrb[0].mxu0
  %v429 = vadd.f32 1e-05, %v428
  %v430 = vpop.f32.mrb[0].mxu0
  %431 = vmatprep.mubr.bf16.mxu0 0
  %432 = vmatmul.mubr.bf16.gmra.mrb[0].mxu0 %v302
  %v433 = vpop.f32.mrb[0].mxu0
  %v434 = vadd.f32 1e-05, %v433
  %v435 = vpop.f32.mrb[0].mxu0
  %v436 = vpop.f32.mrb[0].mxu0
  %v437 = vadd.f32 1e-05, %v436
  %v438 = vpop.f32.mrb[0].mxu0
  %439 = vdwg.mxu0
  %v440 = vlog2.pop %v402
  %v441 = vmul.f32 %v440, 0.6931472
  %v442 = vlog2.pop %v405
  %v443 = vmul.f32 %v442, 0.6931472
  %v444 = vlog2.pop %v410
  %v445 = vmul.f32 %v444, 0.6931472
  %v446 = vlog2.pop %v413
  %v447 = vmul.f32 %v446, 0.6931472
  %v448 = vlog2.pop %v418
  %v449 = vmul.f32 %v448, 0.6931472
  %v450 = vlog2.pop %v421
  %v451 = vmul.f32 %v450, 0.6931472
  %v452 = vlog2.pop %v426
  %v453 = vmul.f32 %v452, 0.6931472
  %v454 = vlog2.pop %v429
  %v455 = vmul.f32 %v454, 0.6931472
  %v456 = vlog2.pop %v434
  %v457 = vmul.f32 %v456, 0.6931472
  %v458 = vlog2.pop %v437
  %v459 = vmul.f32 %v458, 0.6931472
  %v460 = vadd.f32 %v441, 4.0
  %v461 = vadd.f32 %v443, 4.0
  %v462 = vadd.f32 %v445, 4.0
  %v463 = vadd.f32 %v447, 4.0
  %v464 = vadd.f32 %v449, 4.0
  %v465 = vadd.f32 %v451, 4.0
  %v466 = vadd.f32 %v453, 4.0
  %v467 = vadd.f32 %v455, 4.0
  %v468 = vadd.f32 %v457, 4.0
  %v469 = vadd.f32 %v459, 4.0
  %v470 = vmul.f32 %v460, 0.25
  %v471 = vmul.f32 %v461, 0.25
  %v472 = vmul.f32 %v462, 0.25
  %v473 = vmul.f32 %v463, 0.25
  %v474 = vmul.f32 %v464, 0.25
  %v475 = vmul.f32 %v465, 0.25
  %v476 = vmul.f32 %v466, 0.25
  %v477 = vmul.f32 %v467, 0.25
  %v478 = vmul.f32 %v468, 0.25
  %v479 = vmul.f32 %v469, 0.25
  %s480 = sadd.s32 0, 0
  %s481 = smul.u32 %s480, 40
  %v482 = vlaneseq
  %v483 = vshrl.u32 %v482, 7
  %v484 = vadd.s32 %v483, 8
  %v485 = vadd.s32 %v483, 16
  %v486 = vadd.s32 %v483, 24
  %v487 = vadd.s32 %v483, 32
  %v488 = vstv %s481
  %v489 = vadd.s32 %v488, %v483
  %v490 = vadd.s32 %v488, %v484
  %v491 = vadd.s32 %v488, %v485
  %v492 = vadd.s32 %v488, %v486
  %v493 = vadd.s32 %v488, %v487
  %v494 = vlaneseq
  %v495 = vand.u32 %v494, 127
  %vm496 = vcmp.lt.s32.totalorder %v489, 34
  %vm497 = vcmp.lt.s32.totalorder %v490, 34
  %vm498 = vcmp.lt.s32.totalorder %v491, 34
  %vm499 = vcmp.lt.s32.totalorder %v492, 34
  %vm500 = vcmp.lt.s32.totalorder %v493, 34
  %vm501 = vcmp.lt.s32.totalorder %v495, 16
  %vm502 = vmand %vm496, %vm501
  %vm503 = vmand %vm497, %vm501
  %vm504 = vmand %vm498, %vm501
  %vm505 = vmand %vm499, %vm501
  %vm506 = vmand %vm500, %vm501
  %v507 = vsel %vm502, 1, 0
  %v508 = vsel %vm503, 1, 0
  %v509 = vsel %vm504, 1, 0
  %v510 = vsel %vm505, 1, 0
  %v511 = vsel %vm506, 1, 0
  %v512 = vcvt.s32.f32 %v507
  %v513 = vcvt.s32.f32 %v508
  %v514 = vcvt.s32.f32 %v509
  %v515 = vcvt.s32.f32 %v510
  %v516 = vcvt.s32.f32 %v511
  %v517 = vsub.f32 %v475, %v470
  %v518 = vsub.f32 %v476, %v471
  %v519 = vsub.f32 %v477, %v472
  %v520 = vsub.f32 %v478, %v473
  %v521 = vsub.f32 %v479, %v474
  %v522 = vand.u32 2147483647, %v517
  %v523 = vand.u32 2147483647, %v518
  %v524 = vand.u32 2147483647, %v519
  %v525 = vand.u32 2147483647, %v520
  %v526 = vand.u32 2147483647, %v521
  %v527 = vmul.f32 %v522, %v512
  %v528 = vmul.f32 %v523, %v513
  %v529 = vmul.f32 %v524, %v514
  %v530 = vmul.f32 %v525, %v515
  %v531 = vmul.f32 %v526, %v516
  %v532 = vand.u32 2147483647, %v475
  %v533 = vand.u32 2147483647, %v476
  %v534 = vand.u32 2147483647, %v477
  %v535 = vand.u32 2147483647, %v478
  %v536 = vand.u32 2147483647, %v479
  %v537 = vmul.f32 %v532, %v512
  %v538 = vmul.f32 %v533, %v513
  %v539 = vmul.f32 %v534, %v514
  %v540 = vmul.f32 %v535, %v515
  %v541 = vmul.f32 %v536, %v516
  %v542 = vadd.f32 %v527, %v528
  %v543 = vadd.f32 %v542, %v529
  %v544 = vadd.f32 %v543, %v530
  %v545 = vadd.f32 %v544, %v531
  %v546 = vadd.f32 %v537, %v538
  %v547 = vadd.f32 %v546, %v539
  %v548 = vadd.f32 %v547, %v540
  %v549 = vadd.f32 %v548, %v541
  %v550 = vld [vmem:[%s3] sm:$0xff]
  %v551 = vadd.f32 %v550, %v545
  %552 = vst [vmem:[%s3] sm:$0xff] %v551
  %s553 = scalar_lea.vmem %s3, 8
  %v554 = vld [vmem:[%s553] sm:$0xff]
  %v555 = vadd.f32 %v554, %v549
  %556 = vst [vmem:[%s553] sm:$0xff] %v555
  // Predicated region
  $region18: #{_forward_impl.3} parent=0 // pred_check
    _
  $region19: #{_forward_impl.3} parent=0 // pred_check_branch
    %558 = sbr.rel (0) target = $region21
  $region20: #{_forward_impl.3} parent=0 // pred_region
    _
  $region21: #{_forward_impl.3} parent=0 // pred_fallthru
    _
  // Predicated region
  $region22: #{_forward_impl.3} parent=0 // pred_check
    _
  $region23: #{_forward_impl.3} parent=0 // pred_check_branch
    %560 = sbr.rel (0) target = $region25
  $region24: #{_forward_impl.3} parent=0 // pred_region
    _
  $region25: #{_forward_impl.3} parent=0 // pred_fallthru
    _

// kernel: _forward_impl.5
$region0: #{_forward_impl.5}
  #allocation0 [shape = 'u32[]', space=smem, size = 0x4, offset = 0x4, fixed_abs, tag = 'smem constant byte address 0x4 - core index']
  #allocation1 [shape = 'u32[144,128]{1,0:T(1,128)}', space=vmem, size = 0x12000, scoped, tag = 'internal scratch']
  %s0 = inlined_call_operand.vmem [shape: bf16[2,72,64], index: 0, kind: input, shape index: {}]
  %s1 = inlined_call_operand.vmem [shape: bf16[64,256], index: 1, kind: input, shape index: {}]
  %s2 = inlined_call_operand.vmem [shape: bf16[128,128], index: 2, kind: input, shape index: {}]
  %s3 = inlined_call_operand.vmem [shape: f32[1,2,8,128], index: 3, kind: output, shape index: {}]
  %s4 = sld [smem:[#allocation0]]
  $region26: #{_forward_impl.5} parent=0
    _
  %s6 = ssub.s32 1, %s4
  %s7 = scalar_select 0, %s6, %s4
  // Predicated region
  $region2: #{_forward_impl.5} parent=0 // pred_check
    _
  $region3: #{_forward_impl.5} parent=0 // pred_check_branch
    %9 = sbr.rel (0) target = $region5
  $region4: #{_forward_impl.5} parent=0 // pred_region
    %s10 = sadd.s32 0, 0
    %s11 = smul.u32 9, %s10
    %p12 = scmp.lt.s32.totalorder %s11, 8
    %s13 = scalar_select %p12, %s11, 8
    %s14 = smul.addr %s13, 4
    %s15 = scalar_lea.vmem %s0, %s14
    %s16 = sadd.s32 0, 0
    %s17 = smul.u32 9, %s16
  $region5: #{_forward_impl.5} parent=0 // pred_fallthru
    _
  // Predicated region
  $region6: #{_forward_impl.5} parent=0 // pred_check
    _
  $region7: #{_forward_impl.5} parent=0 // pred_check_branch
    %19 = sbr.rel (0) target = $region9
  $region8: #{_forward_impl.5} parent=0 // pred_region
    _
  $region9: #{_forward_impl.5} parent=0 // pred_fallthru
    _
  // Predicated region
  $region10: #{_forward_impl.5} parent=0 // pred_check
    _
  $region11: #{_forward_impl.5} parent=0 // pred_check_branch
    %21 = sbr.rel (0) target = $region13
  $region12: #{_forward_impl.5} parent=0 // pred_region
    _
  $region13: #{_forward_impl.5} parent=0 // pred_fallthru
    _
  %s22 = sadd.s32 0, 0
  %s23 = smul.u32 9, %s22
  %p24 = scmp.lt.s32.totalorder %s23, 8
  %s25 = scalar_select %p24, %s23, 8
  %s26 = smul.addr %s25, 4
  %s27 = scalar_lea.vmem %s0, %s26
  %s28 = sadd.s32 0, 0
  %s29 = smul.u32 9, %s28
  %p30 = scmp.lt.s32.totalorder %s29, 8
  %s31 = scalar_select %p30, %s29, 8
  %s32 = smul.addr %s31, 4
  %s33 = scalar_lea.vmem %s0, %s32
  %s34 = sadd.s32 0, 0
  %s35 = smul.u32 9, %s34
  %p37 = scmp.eq.s32.totalorder 0, 0
  // Predicated region
  $region14: #{_forward_impl.5} parent=0 // pred_check
    %p38 = pneg %p37
  $region15: #{_forward_impl.5} parent=0 // pred_check_branch
    %40 = sbr.rel (%p38) target = $region17
  $region16: #{_forward_impl.5} parent=0 // pred_region
    %41 = vst [vmem:[%s3] sm:$0xff] 0.0
    %42 = vst [vmem:[%s3 + $0x8] sm:$0xff] 0.0
  $region17: #{_forward_impl.5} parent=0 // pred_fallthru
    _
  %v43 = vld [vmem:[%s33] sm:$0xf]
  %v44 = vld [vmem:[%s33 + $0x4] sm:$0xf]
  %v45 = vld [vmem:[%s33 + $0x8] sm:$0xf]
  %v46 = vld [vmem:[%s33 + $0xc] sm:$0xf]
  %v47 = vld [vmem:[%s33 + $0x10] sm:$0xf]
  %v48 = vld [vmem:[%s33 + $0x14] sm:$0xf]
  %v49 = vld [vmem:[%s33 + $0x18] sm:$0xf]
  %v50 = vld [vmem:[%s33 + $0x1c] sm:$0xf]
  %v51 = vld [vmem:[%s33 + $0x20] sm:$0xf]
  %s52 = scalar_lea.vmem %s33, 36
  %v53 = vld [vmem:[%s52] sm:$0xf]
  %v54 = vld [vmem:[%s52 + $0x4] sm:$0xf]
  %v55 = vld [vmem:[%s52 + $0x8] sm:$0xf]
  %v56 = vld [vmem:[%s52 + $0xc] sm:$0xf]
  %v57 = vld [vmem:[%s52 + $0x10] sm:$0xf]
  %v58 = vld [vmem:[%s52 + $0x14] sm:$0xf]
  %v59 = vld [vmem:[%s52 + $0x18] sm:$0xf]
  %v60 = vld [vmem:[%s52 + $0x1c] sm:$0xf]
  %v61 = vld [vmem:[%s52 + $0x20] sm:$0xf]
  %v71 = vunpack.c.l.b16 %v43
  %v72 = vunpack.c.l.b16 %v44
  %v73 = vunpack.c.l.b16 %v45
  %v74 = vunpack.c.l.b16 %v46
  %v75 = vunpack.c.l.b16 %v47
  %v76 = vunpack.c.l.b16 %v48
  %v77 = vunpack.c.l.b16 %v49
  %v78 = vunpack.c.l.b16 %v50
  %v79 = vunpack.c.l.b16 %v51
  %v80 = vpack.c.b16 %v72, %v71
  %v81 = vpack.c.b16 %v74, %v73
  %v82 = vpack.c.b16 %v76, %v75
  %v83 = vpack.c.b16 %v78, %v77
  %v84 = vpack.c.b16 %v79, %v79
  %v94 = vunpack.c.l.b16 %v53
  %v95 = vunpack.c.l.b16 %v54
  %v96 = vunpack.c.l.b16 %v55
  %v97 = vunpack.c.l.b16 %v56
  %v98 = vunpack.c.l.b16 %v57
  %v99 = vunpack.c.l.b16 %v58
  %v100 = vunpack.c.l.b16 %v59
  %v101 = vunpack.c.l.b16 %v60
  %v102 = vunpack.c.l.b16 %v61
  %v103 = vpack.c.b16 %v94, %v94
  %v104 = vpack.c.b16 %v96, %v95
  %v105 = vpack.c.b16 %v98, %v97
  %v106 = vpack.c.b16 %v100, %v99
  %v107 = vpack.c.b16 %v102, %v101
  %vm108 = vcmask 1043456
  %v111 = vsel %vm108, %v84, %v103
  %v112 = vld [vmem:[%s1] sm:$0xff]
  %v113 = vld [vmem:[%s1 + $0x8] sm:$0xff]
  %v114 = vld [vmem:[%s1 + $0x10] sm:$0xff]
  %v115 = vld [vmem:[%s1 + $0x18] sm:$0xff]
  %v116 = vld [vmem:[%s1 + $0x20] sm:$0xff]
  %v117 = vld [vmem:[%s1 + $0x28] sm:$0xff]
  %v118 = vld [vmem:[%s1 + $0x30] sm:$0xff]
  %v119 = vld [vmem:[%s1 + $0x38] sm:$0xff]
  %v128 = vunpack.c.l.b16 %v112
  %v129 = vunpack.c.h.b16 %v112
  %v130 = vunpack.c.l.b16 %v113
  %v131 = vunpack.c.h.b16 %v113
  %v132 = vunpack.c.l.b16 %v114
  %v133 = vunpack.c.h.b16 %v114
  %v134 = vunpack.c.l.b16 %v115
  %v135 = vunpack.c.h.b16 %v115
  %v136 = vunpack.c.l.b16 %v116
  %v137 = vunpack.c.h.b16 %v116
  %v138 = vunpack.c.l.b16 %v117
  %v139 = vunpack.c.h.b16 %v117
  %v140 = vunpack.c.l.b16 %v118
  %v141 = vunpack.c.h.b16 %v118
  %v142 = vunpack.c.l.b16 %v119
  %v143 = vunpack.c.h.b16 %v119
  %v144 = vpack.c.b16 %v130, %v128
  %v145 = vpack.c.b16 %v131, %v129
  %v146 = vpack.c.b16 %v134, %v132
  %v147 = vpack.c.b16 %v135, %v133
  %v148 = vpack.c.b16 %v138, %v136
  %v149 = vpack.c.b16 %v139, %v137
  %v150 = vpack.c.b16 %v142, %v140
  %v151 = vpack.c.b16 %v143, %v141
  %vm160 = vcmask 523264
  %v162 = vsel %vm160, %v80, 0
  %v165 = vsel %vm160, %v81, 0
  %v168 = vsel %vm160, %v82, 0
  %v171 = vsel %vm160, %v83, 0
  %v173 = vsel %vm160, %v111, 0
  %v176 = vsel %vm160, %v104, 0
  %v179 = vsel %vm160, %v105, 0
  %v182 = vsel %vm160, %v106, 0
  %v185 = vsel %vm160, %v107, 0
  %187 = vmatprep.subr.bf16.mxu0 %v145
  %188 = vmatpush1.bf16.msra.mxu0 %v144
  %189 = vmatprep.subr.bf16.mxu0 %v147
  %190 = vmatpush1.bf16.msra.mxu0 %v146
  %191 = vmatprep.subr.bf16.mxu0 %v149
  %192 = vmatpush1.bf16.msra.mxu0 %v148
  %193 = vmatprep.subr.bf16.mxu0 %v151
  %194 = vmatpush1.bf16.msra.mxu0 %v150
  %195 = vmatprep.subr.bf16.mxu0 0
  %196 = vmatpush1.bf16.msra.mxu0 0
  %197 = vmatprep.subr.bf16.mxu0 0
  %198 = vmatpush1.bf16.msra.mxu0 0
  %199 = vmatprep.subr.bf16.mxu0 0
  %200 = vmatpush1.bf16.msra.mxu0 0
  %201 = vmatprep.subr.bf16.mxu0 0
  %202 = vmatpush1.bf16.msra.mxu0 0
  %203 = vmatprep.subr.bf16.mxu0 0
  %204 = vmatpush1.bf16.msra.mxu0 0
  %205 = vmatprep.subr.bf16.mxu0 0
  %206 = vmatpush1.bf16.msra.mxu0 0
  %207 = vmatprep.subr.bf16.mxu0 0
  %208 = vmatpush1.bf16.msra.mxu0 0
  %209 = vmatprep.subr.bf16.mxu0 0
  %210 = vmatpush1.bf16.msra.mxu0 0
  %211 = vmatprep.subr.bf16.mxu0 0
  %212 = vmatpush1.bf16.msra.mxu0 0
  %213 = vmatprep.subr.bf16.mxu0 0
  %214 = vmatpush1.bf16.msra.mxu0 0
  %215 = vmatprep.subr.bf16.mxu0 0
  %216 = vmatpush1.bf16.msra.mxu0 0
  %217 = vmatprep.subr.bf16.mxu0 0
  %218 = vmatpush1.bf16.msra.mxu0 0
  %219 = vmatprep.mubr.bf16.mxu0 0
  %220 = vmatmul.mubr.bf16.gmra.mrb[0].mxu0 %v162
  %v221 = vpop.f32.mrb[0].mxu0
  %v222 = vadd.f32 0.0, %v221
  %v223 = vpop.f32.mrb[0].mxu0
  %v224 = vadd.f32 0.0, %v223
  %v225 = vpop.f32.mrb[0].mxu0
  %v226 = vadd.f32 0.0, %v225
  %v227 = vpop.f32.mrb[0].mxu0
  %v228 = vadd.f32 0.0, %v227
  %229 = vmatprep.mubr.bf16.mxu0 0
  %230 = vmatmul.mubr.bf16.gmra.mrb[0].mxu0 %v165
  %v231 = vpop.f32.mrb[0].mxu0
  %v232 = vadd.f32 0.0, %v231
  %v233 = vpop.f32.mrb[0].mxu0
  %v234 = vadd.f32 0.0, %v233
  %v235 = vpop.f32.mrb[0].mxu0
  %v236 = vadd.f32 0.0, %v235
  %v237 = vpop.f32.mrb[0].mxu0
  %v238 = vadd.f32 0.0, %v237
  %239 = vmatprep.mubr.bf16.mxu0 0
  %240 = vmatmul.mubr.bf16.gmra.mrb[0].mxu0 %v168
  %v241 = vpop.f32.mrb[0].mxu0
  %v242 = vadd.f32 0.0, %v241
  %v243 = vpop.f32.mrb[0].mxu0
  %v244 = vadd.f32 0.0, %v243
  %v245 = vpop.f32.mrb[0].mxu0
  %v246 = vadd.f32 0.0, %v245
  %v247 = vpop.f32.mrb[0].mxu0
  %v248 = vadd.f32 0.0, %v247
  %249 = vmatprep.mubr.bf16.mxu0 0
  %250 = vmatmul.mubr.bf16.gmra.mrb[0].mxu0 %v171
  %v251 = vpop.f32.mrb[0].mxu0
  %v252 = vadd.f32 0.0, %v251
  %v253 = vpop.f32.mrb[0].mxu0
  %v254 = vadd.f32 0.0, %v253
  %v255 = vpop.f32.mrb[0].mxu0
  %v256 = vadd.f32 0.0, %v255
  %v257 = vpop.f32.mrb[0].mxu0
  %v258 = vadd.f32 0.0, %v257
  %259 = vmatprep.mubr.bf16.mxu0 0
  %260 = vmatmul.mubr.bf16.gmra.mrb[0].mxu0 %v173
  %v261 = vpop.f32.mrb[0].mxu0
  %v262 = vadd.f32 0.0, %v261
  %v263 = vpop.f32.mrb[0].mxu0
  %v264 = vadd.f32 0.0, %v263
  %v265 = vpop.f32.mrb[0].mxu0
  %v266 = vadd.f32 0.0, %v265
  %v267 = vpop.f32.mrb[0].mxu0
  %v268 = vadd.f32 0.0, %v267
  %269 = vmatprep.mubr.bf16.mxu0 0
  %270 = vmatmul.mubr.bf16.gmra.mrb[0].mxu0 %v176
  %v271 = vpop.f32.mrb[0].mxu0
  %v272 = vadd.f32 0.0, %v271
  %v273 = vpop.f32.mrb[0].mxu0
  %v274 = vadd.f32 0.0, %v273
  %v275 = vpop.f32.mrb[0].mxu0
  %v276 = vadd.f32 0.0, %v275
  %v277 = vpop.f32.mrb[0].mxu0
  %v278 = vadd.f32 0.0, %v277
  %279 = vmatprep.mubr.bf16.mxu0 0
  %280 = vmatmul.mubr.bf16.gmra.mrb[0].mxu0 %v179
  %v281 = vpop.f32.mrb[0].mxu0
  %v282 = vadd.f32 0.0, %v281
  %v283 = vpop.f32.mrb[0].mxu0
  %v284 = vadd.f32 0.0, %v283
  %v285 = vpop.f32.mrb[0].mxu0
  %v286 = vadd.f32 0.0, %v285
  %v287 = vpop.f32.mrb[0].mxu0
  %v288 = vadd.f32 0.0, %v287
  %289 = vmatprep.mubr.bf16.mxu0 0
  %290 = vmatmul.mubr.bf16.gmra.mrb[0].mxu0 %v182
  %v291 = vpop.f32.mrb[0].mxu0
  %v292 = vadd.f32 0.0, %v291
  %v293 = vpop.f32.mrb[0].mxu0
  %v294 = vadd.f32 0.0, %v293
  %v295 = vpop.f32.mrb[0].mxu0
  %v296 = vadd.f32 0.0, %v295
  %v297 = vpop.f32.mrb[0].mxu0
  %v298 = vadd.f32 0.0, %v297
  %299 = vmatprep.mubr.bf16.mxu0 0
  %300 = vmatmul.mubr.bf16.gmra.mrb[0].mxu0 %v185
  %v301 = vpop.f32.mrb[0].mxu0
  %v302 = vadd.f32 0.0, %v301
  %v303 = vpop.f32.mrb[0].mxu0
  %v304 = vadd.f32 0.0, %v303
  %v305 = vpop.f32.mrb[0].mxu0
  %v306 = vadd.f32 0.0, %v305
  %v307 = vpop.f32.mrb[0].mxu0
  %v308 = vadd.f32 0.0, %v307
  %309 = vdwg.mxu0
  %v310 = vmul.f32 %v222, %v222
  %v311 = vmul.f32 %v226, %v226
  %v312 = vmul.f32 %v232, %v232
  %v313 = vmul.f32 %v236, %v236
  %v314 = vmul.f32 %v242, %v242
  %v315 = vmul.f32 %v246, %v246
  %v316 = vmul.f32 %v252, %v252
  %v317 = vmul.f32 %v256, %v256
  %v318 = vmul.f32 %v262, %v262
  %v319 = vmul.f32 %v266, %v266
  %v320 = vmul.f32 %v272, %v272
  %v321 = vmul.f32 %v276, %v276
  %v322 = vmul.f32 %v282, %v282
  %v323 = vmul.f32 %v286, %v286
  %v324 = vmul.f32 %v292, %v292
  %v325 = vmul.f32 %v296, %v296
  %v326 = vmul.f32 %v302, %v302
  %v327 = vmul.f32 %v306, %v306
  %v328 = vmul.f32 %v224, %v224
  %v329 = vmul.f32 %v228, %v228
  %v330 = vmul.f32 %v234, %v234
  %v331 = vmul.f32 %v238, %v238
  %v332 = vmul.f32 %v244, %v244
  %v333 = vmul.f32 %v248, %v248
  %v334 = vmul.f32 %v254, %v254
  %v335 = vmul.f32 %v258, %v258
  %v336 = vmul.f32 %v264, %v264
  %v337 = vmul.f32 %v268, %v268
  %v338 = vmul.f32 %v274, %v274
  %v339 = vmul.f32 %v278, %v278
  %v340 = vmul.f32 %v284, %v284
  %v341 = vmul.f32 %v288, %v288
  %v342 = vmul.f32 %v294, %v294
  %v343 = vmul.f32 %v298, %v298
  %v344 = vmul.f32 %v304, %v304
  %v345 = vmul.f32 %v308, %v308
  %v346 = vadd.f32 %v310, %v328
  %v347 = vadd.f32 %v311, %v329
  %v348 = vadd.f32 %v312, %v330
  %v349 = vadd.f32 %v313, %v331
  %v350 = vadd.f32 %v314, %v332
  %v351 = vadd.f32 %v315, %v333
  %v352 = vadd.f32 %v316, %v334
  %v353 = vadd.f32 %v317, %v335
  %v354 = vadd.f32 %v318, %v336
  %v355 = vadd.f32 %v319, %v337
  %v356 = vadd.f32 %v320, %v338
  %v357 = vadd.f32 %v321, %v339
  %v358 = vadd.f32 %v322, %v340
  %v359 = vadd.f32 %v323, %v341
  %v360 = vadd.f32 %v324, %v342
  %v361 = vadd.f32 %v325, %v343
  %v362 = vadd.f32 %v326, %v344
  %v363 = vadd.f32 %v327, %v345
  %v364 = vpack.c.bf16 %v347, %v346
  %v365 = vpack.c.bf16 %v349, %v348
  %v366 = vpack.c.bf16 %v351, %v350
  %v367 = vpack.c.bf16 %v353, %v352
  %v368 = vpack.c.bf16 %v355, %v354
  %v369 = vpack.c.bf16 %v357, %v356
  %v370 = vpack.c.bf16 %v359, %v358
  %v371 = vpack.c.bf16 %v361, %v360
  %v372 = vpack.c.bf16 %v363, %v362
  %v373 = vld [vmem:[%s2] sm:$0xf]
  %v374 = vld [vmem:[%s2 + $0x4] sm:$0xf]
  %v375 = vld [vmem:[%s2 + $0x8] sm:$0xf]
  %v376 = vld [vmem:[%s2 + $0xc] sm:$0xf]
  %v377 = vld [vmem:[%s2 + $0x10] sm:$0xf]
  %v378 = vld [vmem:[%s2 + $0x14] sm:$0xf]
  %v379 = vld [vmem:[%s2 + $0x18] sm:$0xf]
  %v380 = vld [vmem:[%s2 + $0x1c] sm:$0xf]
  %v381 = vld [vmem:[%s2 + $0x20] sm:$0xf]
  %v382 = vld [vmem:[%s2 + $0x24] sm:$0xf]
  %v383 = vld [vmem:[%s2 + $0x28] sm:$0xf]
  %v384 = vld [vmem:[%s2 + $0x2c] sm:$0xf]
  %v385 = vld [vmem:[%s2 + $0x30] sm:$0xf]
  %v386 = vld [vmem:[%s2 + $0x34] sm:$0xf]
  %v387 = vld [vmem:[%s2 + $0x38] sm:$0xf]
  %v388 = vld [vmem:[%s2 + $0x3c] sm:$0xf]
  %v405 = vunpack.c.l.b16 %v373
  %v406 = vunpack.c.l.b16 %v374
  %v407 = vunpack.c.l.b16 %v375
  %v408 = vunpack.c.l.b16 %v376
  %v409 = vunpack.c.l.b16 %v377
  %v410 = vunpack.c.l.b16 %v378
  %v411 = vunpack.c.l.b16 %v379
  %v412 = vunpack.c.l.b16 %v380
  %v413 = vunpack.c.l.b16 %v381
  %v414 = vunpack.c.l.b16 %v382
  %v415 = vunpack.c.l.b16 %v383
  %v416 = vunpack.c.l.b16 %v384
  %v417 = vunpack.c.l.b16 %v385
  %v418 = vunpack.c.l.b16 %v386
  %v419 = vunpack.c.l.b16 %v387
  %v420 = vunpack.c.l.b16 %v388
  %v421 = vpack.c.b16 %v406, %v405
  %v422 = vpack.c.b16 %v408, %v407
  %v423 = vpack.c.b16 %v410, %v409
  %v424 = vpack.c.b16 %v412, %v411
  %v425 = vpack.c.b16 %v414, %v413
  %v426 = vpack.c.b16 %v416, %v415
  %v427 = vpack.c.b16 %v418, %v417
  %v428 = vpack.c.b16 %v420, %v419
  %437 = vmatprep.subr.bf16.mxu0 0
  %438 = vmatpush1.bf16.msra.mxu0 %v421
  %439 = vmatprep.subr.bf16.mxu0 0
  %440 = vmatpush1.bf16.msra.mxu0 %v422
  %441 = vmatprep.subr.bf16.mxu0 0
  %442 = vmatpush1.bf16.msra.mxu0 %v423
  %443 = vmatprep.subr.bf16.mxu0 0
  %444 = vmatpush1.bf16.msra.mxu0 %v424
  %445 = vmatprep.subr.bf16.mxu0 0
  %446 = vmatpush1.bf16.msra.mxu0 %v425
  %447 = vmatprep.subr.bf16.mxu0 0
  %448 = vmatpush1.bf16.msra.mxu0 %v426
  %449 = vmatprep.subr.bf16.mxu0 0
  %450 = vmatpush1.bf16.msra.mxu0 %v427
  %451 = vmatprep.subr.bf16.mxu0 0
  %452 = vmatpush1.bf16.msra.mxu0 %v428
  %453 = vmatprep.subr.bf16.mxu0 0
  %454 = vmatpush1.bf16.msra.mxu0 0
  %455 = vmatprep.subr.bf16.mxu0 0
  %456 = vmatpush1.bf16.msra.mxu0 0
  %457 = vmatprep.subr.bf16.mxu0 0
  %458 = vmatpush1.bf16.msra.mxu0 0
  %459 = vmatprep.subr.bf16.mxu0 0
  %460 = vmatpush1.bf16.msra.mxu0 0
  %461 = vmatprep.subr.bf16.mxu0 0
  %462 = vmatpush1.bf16.msra.mxu0 0
  %463 = vmatprep.subr.bf16.mxu0 0
  %464 = vmatpush1.bf16.msra.mxu0 0
  %465 = vmatprep.subr.bf16.mxu0 0
  %466 = vmatpush1.bf16.msra.mxu0 0
  %467 = vmatprep.subr.bf16.mxu0 0
  %468 = vmatpush1.bf16.msra.mxu0 0
  %469 = vmatprep.mubr.bf16.mxu0 0
  %470 = vmatmul.mubr.bf16.gmra.mrb[0].mxu0 %v364
  %v471 = vpop.f32.mrb[0].mxu0
  %v472 = vadd.f32 1e-05, %v471
  %v473 = vpop.f32.mrb[0].mxu0
  %v474 = vpop.f32.mrb[0].mxu0
  %v475 = vadd.f32 1e-05, %v474
  %v476 = vpop.f32.mrb[0].mxu0
  %477 = vmatprep.mubr.bf16.mxu0 0
  %478 = vmatmul.mubr.bf16.gmra.mrb[0].mxu0 %v365
  %v479 = vpop.f32.mrb[0].mxu0
  %v480 = vadd.f32 1e-05, %v479
  %v481 = vpop.f32.mrb[0].mxu0
  %v482 = vpop.f32.mrb[0].mxu0
  %v483 = vadd.f32 1e-05, %v482
  %v484 = vpop.f32.mrb[0].mxu0
  %485 = vmatprep.mubr.bf16.mxu0 0
  %486 = vmatmul.mubr.bf16.gmra.mrb[0].mxu0 %v366
  %v487 = vpop.f32.mrb[0].mxu0
  %v488 = vadd.f32 1e-05, %v487
  %v489 = vpop.f32.mrb[0].mxu0
  %v490 = vpop.f32.mrb[0].mxu0
  %v491 = vadd.f32 1e-05, %v490
  %v492 = vpop.f32.mrb[0].mxu0
  %493 = vmatprep.mubr.bf16.mxu0 0
  %494 = vmatmul.mubr.bf16.gmra.mrb[0].mxu0 %v367
  %v495 = vpop.f32.mrb[0].mxu0
  %v496 = vadd.f32 1e-05, %v495
  %v497 = vpop.f32.mrb[0].mxu0
  %v498 = vpop.f32.mrb[0].mxu0
  %v499 = vadd.f32 1e-05, %v498
  %v500 = vpop.f32.mrb[0].mxu0
  %501 = vmatprep.mubr.bf16.mxu0 0
  %502 = vmatmul.mubr.bf16.gmra.mrb[0].mxu0 %v368
  %v503 = vpop.f32.mrb[0].mxu0
  %v504 = vadd.f32 1e-05, %v503
  %v505 = vpop.f32.mrb[0].mxu0
  %v506 = vpop.f32.mrb[0].mxu0
  %v507 = vadd.f32 1e-05, %v506
  %v508 = vpop.f32.mrb[0].mxu0
  %509 = vmatprep.mubr.bf16.mxu0 0
  %510 = vmatmul.mubr.bf16.gmra.mrb[0].mxu0 %v369
  %v511 = vpop.f32.mrb[0].mxu0
  %v512 = vadd.f32 1e-05, %v511
  %v513 = vpop.f32.mrb[0].mxu0
  %v514 = vpop.f32.mrb[0].mxu0
  %v515 = vadd.f32 1e-05, %v514
  %v516 = vpop.f32.mrb[0].mxu0
  %517 = vmatprep.mubr.bf16.mxu0 0
  %518 = vmatmul.mubr.bf16.gmra.mrb[0].mxu0 %v370
  %v519 = vpop.f32.mrb[0].mxu0
  %v520 = vadd.f32 1e-05, %v519
  %v521 = vpop.f32.mrb[0].mxu0
  %v522 = vpop.f32.mrb[0].mxu0
  %v523 = vadd.f32 1e-05, %v522
  %v524 = vpop.f32.mrb[0].mxu0
  %525 = vmatprep.mubr.bf16.mxu0 0
  %526 = vmatmul.mubr.bf16.gmra.mrb[0].mxu0 %v371
  %v527 = vpop.f32.mrb[0].mxu0
  %v528 = vadd.f32 1e-05, %v527
  %v529 = vpop.f32.mrb[0].mxu0
  %v530 = vpop.f32.mrb[0].mxu0
  %v531 = vadd.f32 1e-05, %v530
  %v532 = vpop.f32.mrb[0].mxu0
  %533 = vmatprep.mubr.bf16.mxu0 0
  %534 = vmatmul.mubr.bf16.gmra.mrb[0].mxu0 %v372
  %v535 = vpop.f32.mrb[0].mxu0
  %v536 = vadd.f32 1e-05, %v535
  %v537 = vpop.f32.mrb[0].mxu0
  %v538 = vpop.f32.mrb[0].mxu0
  %v539 = vadd.f32 1e-05, %v538
  %v540 = vpop.f32.mrb[0].mxu0
  %541 = vdwg.mxu0
  %v542 = vlog2.pop %v472
  %v543 = vmul.f32 %v542, 0.6931472
  %v544 = vlog2.pop %v475
  %v545 = vmul.f32 %v544, 0.6931472
  %v546 = vlog2.pop %v480
  %v547 = vmul.f32 %v546, 0.6931472
  %v548 = vlog2.pop %v483
  %v549 = vmul.f32 %v548, 0.6931472
  %v550 = vlog2.pop %v488
  %v551 = vmul.f32 %v550, 0.6931472
  %v552 = vlog2.pop %v491
  %v553 = vmul.f32 %v552, 0.6931472
  %v554 = vlog2.pop %v496
  %v555 = vmul.f32 %v554, 0.6931472
  %v556 = vlog2.pop %v499
  %v557 = vmul.f32 %v556, 0.6931472
  %v558 = vlog2.pop %v504
  %v559 = vmul.f32 %v558, 0.6931472
  %v560 = vlog2.pop %v507
  %v561 = vmul.f32 %v560, 0.6931472
  %v562 = vlog2.pop %v512
  %v563 = vmul.f32 %v562, 0.6931472
  %v564 = vlog2.pop %v515
  %v565 = vmul.f32 %v564, 0.6931472
  %v566 = vlog2.pop %v520
  %v567 = vmul.f32 %v566, 0.6931472
  %v568 = vlog2.pop %v523
  %v569 = vmul.f32 %v568, 0.6931472
  %v570 = vlog2.pop %v528
  %v571 = vmul.f32 %v570, 0.6931472
  %v572 = vlog2.pop %v531
  %v573 = vmul.f32 %v572, 0.6931472
  %v574 = vlog2.pop %v536
  %v575 = vmul.f32 %v574, 0.6931472
  %v576 = vlog2.pop %v539
  %v577 = vmul.f32 %v576, 0.6931472
  %v578 = vadd.f32 %v543, 4.0
  %v579 = vadd.f32 %v545, 4.0
  %v580 = vadd.f32 %v547, 4.0
  %v581 = vadd.f32 %v549, 4.0
  %v582 = vadd.f32 %v551, 4.0
  %v583 = vadd.f32 %v553, 4.0
  %v584 = vadd.f32 %v555, 4.0
  %v585 = vadd.f32 %v557, 4.0
  %v586 = vadd.f32 %v559, 4.0
  %v587 = vadd.f32 %v561, 4.0
  %v588 = vadd.f32 %v563, 4.0
  %v589 = vadd.f32 %v565, 4.0
  %v590 = vadd.f32 %v567, 4.0
  %v591 = vadd.f32 %v569, 4.0
  %v592 = vadd.f32 %v571, 4.0
  %v593 = vadd.f32 %v573, 4.0
  %v594 = vadd.f32 %v575, 4.0
  %v595 = vadd.f32 %v577, 4.0
  %v596 = vmul.f32 %v578, 0.25
  %v597 = vmul.f32 %v579, 0.25
  %v598 = vmul.f32 %v580, 0.25
  %v599 = vmul.f32 %v581, 0.25
  %v600 = vmul.f32 %v582, 0.25
  %v601 = vmul.f32 %v583, 0.25
  %v602 = vmul.f32 %v584, 0.25
  %v603 = vmul.f32 %v585, 0.25
  %v604 = vmul.f32 %v586, 0.25
  %v605 = vmul.f32 %v587, 0.25
  %v606 = vmul.f32 %v588, 0.25
  %v607 = vmul.f32 %v589, 0.25
  %v608 = vmul.f32 %v590, 0.25
  %v609 = vmul.f32 %v591, 0.25
  %v610 = vmul.f32 %v592, 0.25
  %v611 = vmul.f32 %v593, 0.25
  %v612 = vmul.f32 %v594, 0.25
  %v613 = vmul.f32 %v595, 0.25
  %s614 = sadd.s32 0, 0
  %s615 = smul.u32 %s614, 72
  %v616 = vlaneseq
  %v617 = vshrl.u32 %v616, 7
  %v618 = vadd.s32 %v617, 8
  %v619 = vadd.s32 %v617, 16
  %v620 = vadd.s32 %v617, 24
  %v621 = vadd.s32 %v617, 32
  %v622 = vadd.s32 %v617, 40
  %v623 = vadd.s32 %v617, 48
  %v624 = vadd.s32 %v617, 56
  %v625 = vadd.s32 %v617, 64
  %v626 = vstv %s615
  %v627 = vadd.s32 %v626, %v617
  %v628 = vadd.s32 %v626, %v618
  %v629 = vadd.s32 %v626, %v619
  %v630 = vadd.s32 %v626, %v620
  %v631 = vadd.s32 %v626, %v621
  %v632 = vadd.s32 %v626, %v622
  %v633 = vadd.s32 %v626, %v623
  %v634 = vadd.s32 %v626, %v624
  %v635 = vadd.s32 %v626, %v625
  %v636 = vlaneseq
  %v637 = vand.u32 %v636, 127
  %vm638 = vcmp.lt.s32.totalorder %v627, 66
  %vm639 = vcmp.lt.s32.totalorder %v628, 66
  %vm640 = vcmp.lt.s32.totalorder %v629, 66
  %vm641 = vcmp.lt.s32.totalorder %v630, 66
  %vm642 = vcmp.lt.s32.totalorder %v631, 66
  %vm643 = vcmp.lt.s32.totalorder %v632, 66
  %vm644 = vcmp.lt.s32.totalorder %v633, 66
  %vm645 = vcmp.lt.s32.totalorder %v634, 66
  %vm646 = vcmp.lt.s32.totalorder %v635, 66
  %vm647 = vcmp.lt.s32.totalorder %v637, 16
  %vm648 = vmand %vm638, %vm647
  %vm649 = vmand %vm639, %vm647
  %vm650 = vmand %vm640, %vm647
  %vm651 = vmand %vm641, %vm647
  %vm652 = vmand %vm642, %vm647
  %vm653 = vmand %vm643, %vm647
  %vm654 = vmand %vm644, %vm647
  %vm655 = vmand %vm645, %vm647
  %vm656 = vmand %vm646, %vm647
  %v657 = vsel %vm648, 1, 0
  %v658 = vsel %vm649, 1, 0
  %v659 = vsel %vm650, 1, 0
  %v660 = vsel %vm651, 1, 0
  %v661 = vsel %vm652, 1, 0
  %v662 = vsel %vm653, 1, 0
  %v663 = vsel %vm654, 1, 0
  %v664 = vsel %vm655, 1, 0
  %v665 = vsel %vm656, 1, 0
  %v666 = vcvt.s32.f32 %v657
  %v667 = vcvt.s32.f32 %v658
  %v668 = vcvt.s32.f32 %v659
  %v669 = vcvt.s32.f32 %v660
  %v670 = vcvt.s32.f32 %v661
  %v671 = vcvt.s32.f32 %v662
  %v672 = vcvt.s32.f32 %v663
  %v673 = vcvt.s32.f32 %v664
  %v674 = vcvt.s32.f32 %v665
  %v675 = vsub.f32 %v605, %v596
  %v676 = vsub.f32 %v606, %v597
  %v677 = vsub.f32 %v607, %v598
  %v678 = vsub.f32 %v608, %v599
  %v679 = vsub.f32 %v609, %v600
  %v680 = vsub.f32 %v610, %v601
  %v681 = vsub.f32 %v611, %v602
  %v682 = vsub.f32 %v612, %v603
  %v683 = vsub.f32 %v613, %v604
  %v684 = vand.u32 2147483647, %v675
  %v685 = vand.u32 2147483647, %v676
  %v686 = vand.u32 2147483647, %v677
  %v687 = vand.u32 2147483647, %v678
  %v688 = vand.u32 2147483647, %v679
  %v689 = vand.u32 2147483647, %v680
  %v690 = vand.u32 2147483647, %v681
  %v691 = vand.u32 2147483647, %v682
  %v692 = vand.u32 2147483647, %v683
  %v693 = vmul.f32 %v684, %v666
  %v694 = vmul.f32 %v685, %v667
  %v695 = vmul.f32 %v686, %v668
  %v696 = vmul.f32 %v687, %v669
  %v697 = vmul.f32 %v688, %v670
  %v698 = vmul.f32 %v689, %v671
  %v699 = vmul.f32 %v690, %v672
  %v700 = vmul.f32 %v691, %v673
  %v701 = vmul.f32 %v692, %v674
  %v702 = vand.u32 2147483647, %v605
  %v703 = vand.u32 2147483647, %v606
  %v704 = vand.u32 2147483647, %v607
  %v705 = vand.u32 2147483647, %v608
  %v706 = vand.u32 2147483647, %v609
  %v707 = vand.u32 2147483647, %v610
  %v708 = vand.u32 2147483647, %v611
  %v709 = vand.u32 2147483647, %v612
  %v710 = vand.u32 2147483647, %v613
  %v711 = vmul.f32 %v702, %v666
  %v712 = vmul.f32 %v703, %v667
  %v713 = vmul.f32 %v704, %v668
  %v714 = vmul.f32 %v705, %v669
  %v715 = vmul.f32 %v706, %v670
  %v716 = vmul.f32 %v707, %v671
  %v717 = vmul.f32 %v708, %v672
  %v718 = vmul.f32 %v709, %v673
  %v719 = vmul.f32 %v710, %v674
  %v720 = vadd.f32 %v693, %v694
  %v721 = vadd.f32 %v720, %v695
  %v722 = vadd.f32 %v721, %v696
  %v723 = vadd.f32 %v722, %v697
  %v724 = vadd.f32 %v723, %v698
  %v725 = vadd.f32 %v724, %v699
  %v726 = vadd.f32 %v725, %v700
  %v727 = vadd.f32 %v726, %v701
  %v728 = vadd.f32 %v711, %v712
  %v729 = vadd.f32 %v728, %v713
  %v730 = vadd.f32 %v729, %v714
  %v731 = vadd.f32 %v730, %v715
  %v732 = vadd.f32 %v731, %v716
  %v733 = vadd.f32 %v732, %v717
  %v734 = vadd.f32 %v733, %v718
  %v735 = vadd.f32 %v734, %v719
  %v736 = vld [vmem:[%s3] sm:$0xff]
  %v737 = vadd.f32 %v736, %v727
  %738 = vst [vmem:[%s3] sm:$0xff] %v737
  %s739 = scalar_lea.vmem %s3, 8
  %v740 = vld [vmem:[%s739] sm:$0xff]
  %v741 = vadd.f32 %v740, %v735
  %742 = vst [vmem:[%s739] sm:$0xff] %v741
  // Predicated region
  $region18: #{_forward_impl.5} parent=0 // pred_check
    _
  $region19: #{_forward_impl.5} parent=0 // pred_check_branch
    %744 = sbr.rel (0) target = $region21
  $region20: #{_forward_impl.5} parent=0 // pred_region
    _
  $region21: #{_forward_impl.5} parent=0 // pred_fallthru
    _
  // Predicated region
  $region22: #{_forward_impl.5} parent=0 // pred_check
    _
  $region23: #{_forward_impl.5} parent=0 // pred_check_branch
    %746 = sbr.rel (0) target = $region25
  $region24: #{_forward_impl.5} parent=0 // pred_region
    _
  $region25: #{_forward_impl.5} parent=0 // pred_fallthru
    _

</llo_original>
